<compile_context>
chip_gen: v7x
topology: tpu7x:2x2x1
jax: 0.10.0
libtpu: 0.0.40
codegen_flags: <defaults>
</compile_context>

<pallas_src>
import functools

import numpy as np
import jax
import jax.numpy as jnp
from jax.experimental import pallas as pl
from jax.experimental.pallas import tpu as pltpu

# Dims from RSTModel.__init__
BERT_HIDDEN = 768
HIDDEN = 108
NUM_HEADS = 12
HEAD_DIM = HIDDEN // NUM_HEADS   # 9
NUM_LABELS = 3
HP = 128                         # 108 padded to a full lane group


def _round_up(x, m):
    return ((x + m - 1) // m) * m


def _choose_tile_b(B, cap=1024):
    """Pick a batch tile that minimizes padding and gives >=2 grid steps
    (so the 'parallel' axis uses both TensorCores on v7x) whenever B > 8."""
    min_steps = 2 if B > 8 else 1
    n_steps = max(min_steps, -(-B // cap))
    tb = _round_up(-(-B // n_steps), 8)
    return min(tb, cap)


def rst_kernel(left_ref, right_ref,                  # (TB, 768) bf16 pooler outputs
               w_red_ref,                            # (768, 128) bf16
               w_blob_ref,                           # (128, 768) bf16 packed weights
               wsa_ref,                              # (256, 128) bf16
               b_blob_ref,                           # (1, 768)  f32 packed biases
               out_ref):                             # (TB, 128) bf16, lanes 0..2 real
    f32, bf16 = jnp.float32, jnp.bfloat16
    dot = functools.partial(jnp.dot, preferred_element_type=f32)

    # Packed biases (f32) and weights (bf16), all lane slices at 128 offsets.
    b_red = b_blob_ref[:, 0:HP]
    b_qkv = b_blob_ref[:, HP:4 * HP]
    b_sa = b_blob_ref[:, 4 * HP:5 * HP]
    b_c = b_blob_ref[:, 5 * HP:6 * HP]

    w_red = w_red_ref[...]
    w_qkv = w_blob_ref[:, 0:3 * HP]
    pool_s = w_blob_ref[:, 3 * HP:4 * HP]     # block-diag head pooling, /sqrt(d) folded
    pool_t = w_blob_ref[:, 4 * HP:5 * HP]     # head -> lane broadcast matrix
    w_c = w_blob_ref[:, 5 * HP:6 * HP]

    # reduction_layer + fused QKV, once per side.  The RHS (w_red, then w_qkv)
    # stays resident across the two dots; no (2TB,768) row concat or qkv row
    # slices are materialized.
    xl = (dot(left_ref[...], w_red) + b_red).astype(bf16)     # (TB, 128)
    xr = (dot(right_ref[...], w_red) + b_red).astype(bf16)    # (TB, 128)
    qkv_l = dot(xl, w_qkv) + b_qkv                            # (TB, 384) f32
    qkv_r = dot(xr, w_qkv) + b_qkv                            # (TB, 384) f32

    q_l = qkv_l[:, 0:HP];          q_r = qkv_r[:, 0:HP]
    k_l = qkv_l[:, HP:2 * HP];     k_r = qkv_r[:, HP:2 * HP]
    v_l = qkv_l[:, 2 * HP:3 * HP]; v_r = qkv_r[:, 2 * HP:3 * HP]

    # Per-head q.k via the scale-folded pooling matrix: four small dots against
    # the same resident RHS (no (4TB,128) stacking copies).  Lane = head index.
    def head_sum(a, b):
        return dot((a * b).astype(bf16), pool_s)               # (TB, 128) f32

    s_ll = head_sum(q_l, k_l); s_lr = head_sum(q_l, k_r)
    s_rl = head_sum(q_r, k_l); s_rr = head_sum(q_r, k_r)

    # Softmax over the 2 key positions, per head (dropout = identity in eval).
    m_l = jnp.maximum(s_ll, s_lr)
    e_ll = jnp.exp(s_ll - m_l)
    e_lr = jnp.exp(s_lr - m_l)
    inv_l = pl.reciprocal(e_ll + e_lr, approx=True)

    m_r = jnp.maximum(s_rl, s_rr)
    e_rl = jnp.exp(s_rl - m_r)
    e_rr = jnp.exp(s_rr - m_r)
    inv_r = pl.reciprocal(e_rl + e_rr, approx=True)

    # Broadcast per-head probs back to 128 lanes (pool_t is 0/1) and weight
    # the value vectors, summing over the 2 key positions.
    def expand(p):
        return dot(p.astype(bf16), pool_t)                     # (TB, 128) f32

    ctx_l = expand(e_ll * inv_l) * v_l + expand(e_lr * inv_l) * v_r
    ctx_r = expand(e_rl * inv_r) * v_l + expand(e_rr * inv_r) * v_r

    # self_attention_layer on flatten([ctx_l, ctx_r], start_dim=1):
    # lane-concat (128-aligned, cheap) -> one K=256 dot (fills v6e/v7x MXU depth).
    ctx = jnp.concatenate([ctx_l.astype(bf16), ctx_r.astype(bf16)], axis=1)
    h = dot(ctx, wsa_ref[...]) + b_sa                           # (TB, 128) f32

    # classifier (real logits are lanes 0..2); bf16 writeback.
    out_ref[...] = (dot(h.astype(bf16), w_c) + b_c).astype(out_ref.dtype)


def rst_forward(left_pooled, right_pooled, packed, *, tile_b=None):
    w_red, w_blob, wsa, b_blob = packed
    B = left_pooled.shape[0]

    # bf16 activations in HBM (f32 accumulation happens inside the kernel).
    left_pooled = left_pooled.astype(jnp.bfloat16)
    right_pooled = right_pooled.astype(jnp.bfloat16)

    if tile_b is None:
        tile_b = _choose_tile_b(B)
    tile_b = _round_up(tile_b, 8)
    Bp = _round_up(B, tile_b)
    if Bp != B:
        pad = Bp - B
        left_pooled = jnp.pad(left_pooled, ((0, pad), (0, 0)))
        right_pooled = jnp.pad(right_pooled, ((0, pad), (0, 0)))

    grid = (Bp // tile_b,)
    out = pl.pallas_call(
        rst_kernel,
        out_shape=jax.ShapeDtypeStruct((Bp, HP), jnp.bfloat16),
        grid=grid,
        in_specs=[
            pl.BlockSpec((tile_b, BERT_HIDDEN), lambda b: (b, 0)),
            pl.BlockSpec((tile_b, BERT_HIDDEN), lambda b: (b, 0)),
            pl.BlockSpec((BERT_HIDDEN, HP), lambda b: (0, 0)),
            pl.BlockSpec((HP, 6 * HP), lambda b: (0, 0)),
            pl.BlockSpec((2 * HP, HP), lambda b: (0, 0)),
            pl.BlockSpec((1, 6 * HP), lambda b: (0, 0)),
        ],
        out_specs=pl.BlockSpec((tile_b, HP), lambda b: (b, 0)),
        compiler_params=pltpu.CompilerParams(
            dimension_semantics=("parallel",),
            vmem_limit_bytes=48 * 1024 * 1024),
    )(left_pooled, right_pooled, w_red, w_blob, wsa, b_blob)
    return out[:B, :NUM_LABELS].astype(jnp.float32)


def init_params(key):
    """Logical (unpadded) parameters, identical layout to the PyTorch module."""
    ks = jax.random.split(key, 6)

    def linear(k, fan_in, fan_out):
        kw, kb = jax.random.split(k)
        w_t = jax.random.normal(kw, (fan_in, fan_out), jnp.float32) * 0.02
        b = jax.random.normal(kb, (1, fan_out), jnp.float32) * 0.02
        return w_t, b

    p = {}
    p["w_red_t"], p["b_red"] = linear(ks[0], BERT_HIDDEN, HIDDEN)
    p["wq_t"], p["bq"] = linear(ks[1], HIDDEN, HIDDEN)
    p["wk_t"], p["bk"] = linear(ks[2], HIDDEN, HIDDEN)
    p["wv_t"], p["bv"] = linear(ks[3], HIDDEN, HIDDEN)
    p["wsa_t"], p["b_sa"] = linear(ks[4], 2 * HIDDEN, HIDDEN)   # Linear(216 -> 108)
    p["wc_t"], p["bc"] = linear(ks[5], HIDDEN, NUM_LABELS)
    return p


def pack_params(p):
    """Pack / zero-pad params into 4 DMA-friendly kernel arrays (weights bf16)."""
    bf16 = jnp.bfloat16

    def pad2(a, rows, cols):
        return jnp.pad(a, ((0, rows - a.shape[0]), (0, cols - a.shape[1])))

    # Block-diagonal head-pooling matrix: pool[i, h] = 1 iff i // HEAD_DIM == h,
    # with the 1/sqrt(HEAD_DIM) attention scale folded in.
    pool = (jnp.arange(HIDDEN)[:, None] // HEAD_DIM
            == jnp.arange(NUM_HEADS)[None, :]).astype(jnp.float32)
    pool_scaled = pool / jnp.sqrt(jnp.float32(HEAD_DIM))

    w_red = pad2(p["w_red_t"], BERT_HIDDEN, HP).astype(bf16)    # (768, 128)
    w_blob = jnp.concatenate([
        pad2(p["wq_t"], HP, HP),
        pad2(p["wk_t"], HP, HP),
        pad2(p["wv_t"], HP, HP),
        pad2(pool_scaled, HP, HP),
        pad2(pool.T, HP, HP),
        pad2(p["wc_t"], HP, HP),
    ], axis=1).astype(bf16)                                     # (128, 768)
    wsa = jnp.concatenate([
        pad2(p["wsa_t"][:HIDDEN, :], HP, HP),                   # rows for ctx_l lanes
        pad2(p["wsa_t"][HIDDEN:, :], HP, HP),                   # rows for ctx_r lanes
    ], axis=0).astype(bf16)                                     # (256, 128)
    b_blob = jnp.concatenate([
        pad2(p["b_red"], 1, HP),
        pad2(p["bq"], 1, HP),
        pad2(p["bk"], 1, HP),
        pad2(p["bv"], 1, HP),
        pad2(p["b_sa"], 1, HP),
        pad2(p["bc"], 1, HP),
    ], axis=1)                                                  # (1, 768) f32
    return w_red, w_blob, wsa, b_blob


def reference(left_pooled, right_pooled, p):
    """Pure-JAX reference mirroring the PyTorch (reshape-heads) formulation."""
    with jax.default_matmul_precision("highest"):
        li = left_pooled @ p["w_red_t"] + p["b_red"]
        ri = right_pooled @ p["w_red_t"] + p["b_red"]
        x = jnp.stack([li, ri], axis=1)                      # (B, 2, 108)
        B = x.shape[0]

        def heads(w_t, b):
            y = jnp.einsum("bsh,hk->bsk", x, w_t) + b
            return y.reshape(B, 2, NUM_HEADS, HEAD_DIM).transpose(0, 2, 1, 3)

        q = heads(p["wq_t"], p["bq"])
        k = heads(p["wk_t"], p["bk"])
        v = heads(p["wv_t"], p["bv"])
        scores = jnp.einsum("bhqd,bhkd->bhqk", q, k) / jnp.sqrt(
            jnp.float32(HEAD_DIM))
        probs = jax.nn.softmax(scores, axis=-1)
        ctx = jnp.einsum("bhqk,bhkd->bhqd", probs, v)
        ctx = ctx.transpose(0, 2, 1, 3).reshape(B, 2 * HIDDEN)  # flatten(start_dim=1)
        h = ctx @ p["wsa_t"] + p["b_sa"]
        return h @ p["wc_t"] + p["bc"]


if __name__ == "__main__":
    key = jax.random.PRNGKey(0)
    k_param, k_left, k_right = jax.random.split(key, 3)

    B = 8
    params = init_params(k_param)
    packed = pack_params(params)
    left_pooled = jax.random.normal(k_left, (B, BERT_HIDDEN), jnp.float32)
    right_pooled = jax.random.normal(k_right, (B, BERT_HIDDEN), jnp.float32)

    logits = rst_forward(left_pooled, right_pooled, packed)
    jax.block_until_ready(logits)

    ref = reference(left_pooled, right_pooled, params)
    np.testing.assert_allclose(np.asarray(logits), np.asarray(ref),
                               rtol=1e-2, atol=1e-2)

    print("KERNEL_OK")
</pallas_src>

<mosaic_0001>
module attributes {stable_mosaic.version = 11 : i64} {
  func.func @rst_kernel(%arg0: i32, %arg1: memref<8x768xbf16, #tpu.memory_space<vmem>>, %arg2: memref<8x768xbf16, #tpu.memory_space<vmem>>, %arg3: memref<768x128xbf16, #tpu.memory_space<vmem>>, %arg4: memref<128x768xbf16, #tpu.memory_space<vmem>>, %arg5: memref<256x128xbf16, #tpu.memory_space<vmem>>, %arg6: memref<1x768xf32, #tpu.memory_space<vmem>>, %arg7: memref<8x128xbf16, #tpu.memory_space<vmem>>) attributes {dimension_semantics = [#tpu.dimension_semantics<parallel>], iteration_bounds = array<i64: 1>, scalar_prefetch = 0 : i64, scratch_operands = 0 : i64, tpu.core_type = #tpu.core_type<tc>, window_params = [{transform_indices = @transform_0, window_bounds = array<i64: 8, 768>}, {transform_indices = @transform_1, window_bounds = array<i64: 8, 768>}, {pipeline_mode = #tpu.pipeline_mode<synchronous>, transform_indices = @transform_2, window_bounds = array<i64: 768, 128>}, {pipeline_mode = #tpu.pipeline_mode<synchronous>, transform_indices = @transform_3, window_bounds = array<i64: 128, 768>}, {pipeline_mode = #tpu.pipeline_mode<synchronous>, transform_indices = @transform_4, window_bounds = array<i64: 256, 128>}, {pipeline_mode = #tpu.pipeline_mode<synchronous>, transform_indices = @transform_5, window_bounds = array<i64: 1, 768>}, {transform_indices = @transform_6, window_bounds = array<i64: 8, 128>}]} {
    %c0 = arith.constant 0 : index
    %c0_0 = arith.constant 0 : index
    %0 = vector.load %arg6[%c0, %c0_0] : memref<1x768xf32, #tpu.memory_space<vmem>>, vector<1x128xf32>
    %c0_1 = arith.constant 0 : index
    %c128 = arith.constant 128 : index
    %1 = vector.load %arg6[%c0_1, %c128] : memref<1x768xf32, #tpu.memory_space<vmem>>, vector<1x384xf32>
    %c0_2 = arith.constant 0 : index
    %c512 = arith.constant 512 : index
    %2 = vector.load %arg6[%c0_2, %c512] : memref<1x768xf32, #tpu.memory_space<vmem>>, vector<1x128xf32>
    %c0_3 = arith.constant 0 : index
    %c640 = arith.constant 640 : index
    %3 = vector.load %arg6[%c0_3, %c640] : memref<1x768xf32, #tpu.memory_space<vmem>>, vector<1x128xf32>
    %c0_4 = arith.constant 0 : index
    %c0_5 = arith.constant 0 : index
    %4 = vector.load %arg3[%c0_4, %c0_5] : memref<768x128xbf16, #tpu.memory_space<vmem>>, vector<768x128xbf16>
    %c0_6 = arith.constant 0 : index
    %c0_7 = arith.constant 0 : index
    %5 = vector.load %arg4[%c0_6, %c0_7] : memref<128x768xbf16, #tpu.memory_space<vmem>>, vector<128x384xbf16>
    %c0_8 = arith.constant 0 : index
    %c384 = arith.constant 384 : index
    %6 = vector.load %arg4[%c0_8, %c384] : memref<128x768xbf16, #tpu.memory_space<vmem>>, vector<128x128xbf16>
    %c0_9 = arith.constant 0 : index
    %c512_10 = arith.constant 512 : index
    %7 = vector.load %arg4[%c0_9, %c512_10] : memref<128x768xbf16, #tpu.memory_space<vmem>>, vector<128x128xbf16>
    %c0_11 = arith.constant 0 : index
    %c640_12 = arith.constant 640 : index
    %8 = vector.load %arg4[%c0_11, %c640_12] : memref<128x768xbf16, #tpu.memory_space<vmem>>, vector<128x128xbf16>
    %c0_13 = arith.constant 0 : index
    %c0_14 = arith.constant 0 : index
    %9 = vector.load %arg1[%c0_13, %c0_14] : memref<8x768xbf16, #tpu.memory_space<vmem>>, vector<8x768xbf16>
    %cst = arith.constant dense<0.000000e+00> : vector<8x128xf32>
    %10 = tpu.matmul %9, %4, %cst {dimension_numbers = #tpu.dot_dimension_numbers<[1], [0], [0], [1], [0, 0, 1, 1], [], []>} : vector<8x768xbf16>, vector<768x128xbf16>, vector<8x128xf32> -> vector<8x128xf32>
    %11 = vector.broadcast %0 : vector<1x128xf32> to vector<8x128xf32>
    %12 = arith.addf %10, %11 : vector<8x128xf32>
    %13 = arith.truncf %12 : vector<8x128xf32> to vector<8x128xbf16>
    %c0_15 = arith.constant 0 : index
    %c0_16 = arith.constant 0 : index
    %14 = vector.load %arg2[%c0_15, %c0_16] : memref<8x768xbf16, #tpu.memory_space<vmem>>, vector<8x768xbf16>
    %cst_17 = arith.constant dense<0.000000e+00> : vector<8x128xf32>
    %15 = tpu.matmul %14, %4, %cst_17 {dimension_numbers = #tpu.dot_dimension_numbers<[1], [0], [0], [1], [0, 0, 1, 1], [], []>} : vector<8x768xbf16>, vector<768x128xbf16>, vector<8x128xf32> -> vector<8x128xf32>
    %16 = vector.broadcast %0 : vector<1x128xf32> to vector<8x128xf32>
    %17 = arith.addf %15, %16 : vector<8x128xf32>
    %18 = arith.truncf %17 : vector<8x128xf32> to vector<8x128xbf16>
    %cst_18 = arith.constant dense<0.000000e+00> : vector<8x384xf32>
    %19 = tpu.matmul %13, %5, %cst_18 {dimension_numbers = #tpu.dot_dimension_numbers<[1], [0], [0], [1], [0, 0, 1, 1], [], []>} : vector<8x128xbf16>, vector<128x384xbf16>, vector<8x384xf32> -> vector<8x384xf32>
    %20 = vector.broadcast %1 : vector<1x384xf32> to vector<8x384xf32>
    %21 = arith.addf %19, %20 : vector<8x384xf32>
    %cst_19 = arith.constant dense<0.000000e+00> : vector<8x384xf32>
    %22 = tpu.matmul %18, %5, %cst_19 {dimension_numbers = #tpu.dot_dimension_numbers<[1], [0], [0], [1], [0, 0, 1, 1], [], []>} : vector<8x128xbf16>, vector<128x384xbf16>, vector<8x384xf32> -> vector<8x384xf32>
    %23 = vector.broadcast %1 : vector<1x384xf32> to vector<8x384xf32>
    %24 = arith.addf %22, %23 : vector<8x384xf32>
    %25 = vector.extract_strided_slice %21 {offsets = [0, 0], sizes = [8, 128], strides = [1, 1]} : vector<8x384xf32> to vector<8x128xf32>
    %26 = vector.extract_strided_slice %24 {offsets = [0, 0], sizes = [8, 128], strides = [1, 1]} : vector<8x384xf32> to vector<8x128xf32>
    %27 = vector.extract_strided_slice %21 {offsets = [0, 128], sizes = [8, 128], strides = [1, 1]} : vector<8x384xf32> to vector<8x128xf32>
    %28 = vector.extract_strided_slice %24 {offsets = [0, 128], sizes = [8, 128], strides = [1, 1]} : vector<8x384xf32> to vector<8x128xf32>
    %29 = vector.extract_strided_slice %21 {offsets = [0, 256], sizes = [8, 128], strides = [1, 1]} : vector<8x384xf32> to vector<8x128xf32>
    %30 = vector.extract_strided_slice %24 {offsets = [0, 256], sizes = [8, 128], strides = [1, 1]} : vector<8x384xf32> to vector<8x128xf32>
    %31 = arith.mulf %25, %27 : vector<8x128xf32>
    %32 = arith.truncf %31 : vector<8x128xf32> to vector<8x128xbf16>
    %cst_20 = arith.constant dense<0.000000e+00> : vector<8x128xf32>
    %33 = tpu.matmul %32, %6, %cst_20 {dimension_numbers = #tpu.dot_dimension_numbers<[1], [0], [0], [1], [0, 0, 1, 1], [], []>} : vector<8x128xbf16>, vector<128x128xbf16>, vector<8x128xf32> -> vector<8x128xf32>
    %34 = arith.mulf %25, %28 : vector<8x128xf32>
    %35 = arith.truncf %34 : vector<8x128xf32> to vector<8x128xbf16>
    %cst_21 = arith.constant dense<0.000000e+00> : vector<8x128xf32>
    %36 = tpu.matmul %35, %6, %cst_21 {dimension_numbers = #tpu.dot_dimension_numbers<[1], [0], [0], [1], [0, 0, 1, 1], [], []>} : vector<8x128xbf16>, vector<128x128xbf16>, vector<8x128xf32> -> vector<8x128xf32>
    %37 = arith.mulf %26, %27 : vector<8x128xf32>
    %38 = arith.truncf %37 : vector<8x128xf32> to vector<8x128xbf16>
    %cst_22 = arith.constant dense<0.000000e+00> : vector<8x128xf32>
    %39 = tpu.matmul %38, %6, %cst_22 {dimension_numbers = #tpu.dot_dimension_numbers<[1], [0], [0], [1], [0, 0, 1, 1], [], []>} : vector<8x128xbf16>, vector<128x128xbf16>, vector<8x128xf32> -> vector<8x128xf32>
    %40 = arith.mulf %26, %28 : vector<8x128xf32>
    %41 = arith.truncf %40 : vector<8x128xf32> to vector<8x128xbf16>
    %cst_23 = arith.constant dense<0.000000e+00> : vector<8x128xf32>
    %42 = tpu.matmul %41, %6, %cst_23 {dimension_numbers = #tpu.dot_dimension_numbers<[1], [0], [0], [1], [0, 0, 1, 1], [], []>} : vector<8x128xbf16>, vector<128x128xbf16>, vector<8x128xf32> -> vector<8x128xf32>
    %43 = arith.maximumf %33, %36 : vector<8x128xf32>
    %44 = arith.subf %33, %43 : vector<8x128xf32>
    %45 = math.exp %44 : vector<8x128xf32>
    %46 = arith.subf %36, %43 : vector<8x128xf32>
    %47 = math.exp %46 : vector<8x128xf32>
    %48 = arith.addf %45, %47 : vector<8x128xf32>
    %49 = tpu.reciprocal %48 {approx = true} : vector<8x128xf32> -> vector<8x128xf32>
    %50 = arith.maximumf %39, %42 : vector<8x128xf32>
    %51 = arith.subf %39, %50 : vector<8x128xf32>
    %52 = math.exp %51 : vector<8x128xf32>
    %53 = arith.subf %42, %50 : vector<8x128xf32>
    %54 = math.exp %53 : vector<8x128xf32>
    %55 = arith.addf %52, %54 : vector<8x128xf32>
    %56 = tpu.reciprocal %55 {approx = true} : vector<8x128xf32> -> vector<8x128xf32>
    %57 = arith.mulf %45, %49 : vector<8x128xf32>
    %58 = arith.truncf %57 : vector<8x128xf32> to vector<8x128xbf16>
    %cst_24 = arith.constant dense<0.000000e+00> : vector<8x128xf32>
    %59 = tpu.matmul %58, %7, %cst_24 {dimension_numbers = #tpu.dot_dimension_numbers<[1], [0], [0], [1], [0, 0, 1, 1], [], []>} : vector<8x128xbf16>, vector<128x128xbf16>, vector<8x128xf32> -> vector<8x128xf32>
    %60 = arith.mulf %59, %29 : vector<8x128xf32>
    %61 = arith.mulf %47, %49 : vector<8x128xf32>
    %62 = arith.truncf %61 : vector<8x128xf32> to vector<8x128xbf16>
    %cst_25 = arith.constant dense<0.000000e+00> : vector<8x128xf32>
    %63 = tpu.matmul %62, %7, %cst_25 {dimension_numbers = #tpu.dot_dimension_numbers<[1], [0], [0], [1], [0, 0, 1, 1], [], []>} : vector<8x128xbf16>, vector<128x128xbf16>, vector<8x128xf32> -> vector<8x128xf32>
    %64 = arith.mulf %63, %30 : vector<8x128xf32>
    %65 = arith.addf %60, %64 : vector<8x128xf32>
    %66 = arith.mulf %52, %56 : vector<8x128xf32>
    %67 = arith.truncf %66 : vector<8x128xf32> to vector<8x128xbf16>
    %cst_26 = arith.constant dense<0.000000e+00> : vector<8x128xf32>
    %68 = tpu.matmul %67, %7, %cst_26 {dimension_numbers = #tpu.dot_dimension_numbers<[1], [0], [0], [1], [0, 0, 1, 1], [], []>} : vector<8x128xbf16>, vector<128x128xbf16>, vector<8x128xf32> -> vector<8x128xf32>
    %69 = arith.mulf %68, %29 : vector<8x128xf32>
    %70 = arith.mulf %54, %56 : vector<8x128xf32>
    %71 = arith.truncf %70 : vector<8x128xf32> to vector<8x128xbf16>
    %cst_27 = arith.constant dense<0.000000e+00> : vector<8x128xf32>
    %72 = tpu.matmul %71, %7, %cst_27 {dimension_numbers = #tpu.dot_dimension_numbers<[1], [0], [0], [1], [0, 0, 1, 1], [], []>} : vector<8x128xbf16>, vector<128x128xbf16>, vector<8x128xf32> -> vector<8x128xf32>
    %73 = arith.mulf %72, %30 : vector<8x128xf32>
    %74 = arith.addf %69, %73 : vector<8x128xf32>
    %75 = arith.truncf %65 : vector<8x128xf32> to vector<8x128xbf16>
    %76 = arith.truncf %74 : vector<8x128xf32> to vector<8x128xbf16>
    %77 = tpu.concatenate %75, %76 in 1 : vector<8x128xbf16>, vector<8x128xbf16> -> vector<8x256xbf16>
    %c0_28 = arith.constant 0 : index
    %c0_29 = arith.constant 0 : index
    %78 = vector.load %arg5[%c0_28, %c0_29] : memref<256x128xbf16, #tpu.memory_space<vmem>>, vector<256x128xbf16>
    %cst_30 = arith.constant dense<0.000000e+00> : vector<8x128xf32>
    %79 = tpu.matmul %77, %78, %cst_30 {dimension_numbers = #tpu.dot_dimension_numbers<[1], [0], [0], [1], [0, 0, 1, 1], [], []>} : vector<8x256xbf16>, vector<256x128xbf16>, vector<8x128xf32> -> vector<8x128xf32>
    %80 = vector.broadcast %2 : vector<1x128xf32> to vector<8x128xf32>
    %81 = arith.addf %79, %80 : vector<8x128xf32>
    %82 = arith.truncf %81 : vector<8x128xf32> to vector<8x128xbf16>
    %cst_31 = arith.constant dense<0.000000e+00> : vector<8x128xf32>
    %83 = tpu.matmul %82, %8, %cst_31 {dimension_numbers = #tpu.dot_dimension_numbers<[1], [0], [0], [1], [0, 0, 1, 1], [], []>} : vector<8x128xbf16>, vector<128x128xbf16>, vector<8x128xf32> -> vector<8x128xf32>
    %84 = vector.broadcast %3 : vector<1x128xf32> to vector<8x128xf32>
    %85 = arith.addf %83, %84 : vector<8x128xf32>
    %86 = arith.truncf %85 : vector<8x128xf32> to vector<8x128xbf16>
    %c0_32 = arith.constant 0 : index
    %c0_33 = arith.constant 0 : index
    %87 = vector.load %arg7[%c0_32, %c0_33] : memref<8x128xbf16, #tpu.memory_space<vmem>>, vector<8x128xbf16>
    tpu.vector_store %arg7[%c0_32, %c0_33], %86 {strides = array<i32>} : memref<8x128xbf16, #tpu.memory_space<vmem>>, vector<8x128xbf16>,
    return
  }
  func.func @transform_0(%arg0: i32) -> (i32, i32) {
    %c0_i32 = arith.constant 0 : i32
    %c0_i32_0 = arith.constant 0 : i32
    return %arg0, %c0_i32 : i32, i32
  }
  func.func @transform_1(%arg0: i32) -> (i32, i32) {
    %c0_i32 = arith.constant 0 : i32
    %c0_i32_0 = arith.constant 0 : i32
    return %arg0, %c0_i32 : i32, i32
  }
  func.func @transform_2(%arg0: i32) -> (i32, i32) {
    %c0_i32 = arith.constant 0 : i32
    %c0_i32_0 = arith.constant 0 : i32
    %c0_i32_1 = arith.constant 0 : i32
    return %c0_i32, %c0_i32_0 : i32, i32
  }
  func.func @transform_3(%arg0: i32) -> (i32, i32) {
    %c0_i32 = arith.constant 0 : i32
    %c0_i32_0 = arith.constant 0 : i32
    %c0_i32_1 = arith.constant 0 : i32
    return %c0_i32, %c0_i32_0 : i32, i32
  }
  func.func @transform_4(%arg0: i32) -> (i32, i32) {
    %c0_i32 = arith.constant 0 : i32
    %c0_i32_0 = arith.constant 0 : i32
    %c0_i32_1 = arith.constant 0 : i32
    return %c0_i32, %c0_i32_0 : i32, i32
  }
  func.func @transform_5(%arg0: i32) -> (i32, i32) {
    %c0_i32 = arith.constant 0 : i32
    %c0_i32_0 = arith.constant 0 : i32
    %c0_i32_1 = arith.constant 0 : i32
    return %c0_i32, %c0_i32_0 : i32, i32
  }
  func.func @transform_6(%arg0: i32) -> (i32, i32) {
    %c0_i32 = arith.constant 0 : i32
    %c0_i32_0 = arith.constant 0 : i32
    return %arg0, %c0_i32 : i32, i32
  }
}

</mosaic_0001>

<llo_original>
// kernel: tpu_custom_call.1
$region0: #{tpu_custom_call.1}
  #allocation0 [shape = 'u32[]', space=smem, size = 0x4, offset = 0x4, fixed_abs, tag = 'smem constant byte address 0x4 - core index']
  #allocation1 [shape = 'u32[144,128]{1,0:T(1,128)}', space=vmem, size = 0x12000, scoped, tag = 'internal scratch']
  %s0 = inlined_call_operand.hbm [shape: bf16[8,768], index: 0, kind: input, shape index: {}]
  %s1 = inlined_call_operand.hbm [shape: bf16[8,768], index: 1, kind: input, shape index: {}]
  %s2 = inlined_call_operand.hbm [shape: bf16[768,128], index: 2, kind: input, shape index: {}]
  %s3 = inlined_call_operand.hbm [shape: bf16[128,768], index: 3, kind: input, shape index: {}]
  %s4 = inlined_call_operand.hbm [shape: bf16[256,128], index: 4, kind: input, shape index: {}]
  %s5 = inlined_call_operand.vmem [shape: f32[1,768], index: 5, kind: input, shape index: {}]
  %s6 = inlined_call_operand.hbm [shape: bf16[8,128], index: 6, kind: output, shape index: {}]
  %s7 = sld [smem:[#allocation0]]
  $region54: #{tpu_custom_call.1} parent=0
    _
  %s9 = ssub.s32 1, %s7
  %s10 = scalar_select 0, %s9, %s7
  $region1: #{tpu_custom_call.1} parent=0
    #allocation2 [shape = 'u8[12288]{0}', space=vmem, size = 0x3000, scoped, tag = 'input window, operand 0, single buffered']
    #allocation3 [shape = 's32[1]{0}', space=sflag, size = 0x4, scoped, tag = 'scoped memory for tpu_custom_call.1']
    #allocation4 [shape = 's32[1]{0}', space=sflag, size = 0x4, scoped, tag = 'scoped memory for tpu_custom_call.1']
    #allocation5 [shape = 'u8[12288]{0}', space=vmem, size = 0x3000, scoped, tag = 'input window, operand 1, single buffered']
    #allocation6 [shape = 's32[1]{0}', space=sflag, size = 0x4, scoped, tag = 'scoped memory for tpu_custom_call.1']
    #allocation7 [shape = 'u8[196608]{0}', space=vmem, size = 0x30000, scoped, tag = 'input window, operand 2, single buffered']
    #allocation8 [shape = 'u8[196608]{0}', space=vmem, size = 0x30000, scoped, tag = 'input window, operand 3, single buffered']
    #allocation9 [shape = 's32[1]{0}', space=sflag, size = 0x4, scoped, tag = 'scoped memory for tpu_custom_call.1']
    #allocation10 [shape = 'u8[65536]{0}', space=vmem, size = 0x10000, scoped, tag = 'input window, operand 4, single buffered']
    #allocation11 [shape = 'u8[2048]{0}', space=vmem, size = 0x800, scoped, tag = 'output window, operand 0, single buffered']
    %11 = vsyncpa [#allocation3], 0
    %12 = vsyncpa [#allocation6], 0
    %13 = vsyncpa [#allocation9], 0
    %14 = vsyncpa [#allocation4], 0
    // Predicated region
    $region2: #{tpu_custom_call.1} parent=1 // pred_check
      _
    $region3: #{tpu_custom_call.1} parent=1 // pred_check_branch
      %16 = sbr.rel (0) target = $region5
    $region4: #{tpu_custom_call.1} parent=1 // pred_region
      %s18 = ssub.s32 384, 384
      %19 = vsyncadd [#allocation3], %s18
      %s21 = sshll.u32 [#allocation2], 4
      %s22 = int_to_ptr.vmem [resolvable:$true] %s21
      %24 = dma.hbm_to_vmem [thread:$0]  %s0, 384, %s22, [#allocation3]
    $region5: #{tpu_custom_call.1} parent=1 // pred_fallthru
      _
    // Predicated region
    $region6: #{tpu_custom_call.1} parent=1 // pred_check
      _
    $region7: #{tpu_custom_call.1} parent=1 // pred_check_branch
      %26 = sbr.rel (0) target = $region9
    $region8: #{tpu_custom_call.1} parent=1 // pred_region
      %s28 = ssub.s32 384, 384
      %29 = vsyncadd [#allocation6], %s28
      %s31 = sshll.u32 [#allocation5], 4
      %s32 = int_to_ptr.vmem [resolvable:$true] %s31
      %34 = dma.hbm_to_vmem [thread:$0]  %s1, 384, %s32, [#allocation6]
    $region9: #{tpu_custom_call.1} parent=1 // pred_fallthru
      _
    // Predicated region
    $region10: #{tpu_custom_call.1} parent=1 // pred_check
      _
    $region11: #{tpu_custom_call.1} parent=1 // pred_check_branch
      %36 = sbr.rel (0) target = $region13
    $region12: #{tpu_custom_call.1} parent=1 // pred_region
      %s38 = ssub.s32 6144, 6144
      %39 = vsyncadd [#allocation6], %s38
      %s40 = sshll.u32 [#allocation7], 4
      %s41 = int_to_ptr.vmem [resolvable:$true] %s40
      %46 = dma.hbm_to_vmem [thread:$0]  %s2, 6144, %s41, [#allocation6], 64, 64, 4
    $region13: #{tpu_custom_call.1} parent=1 // pred_fallthru
      _
    // Predicated region
    $region14: #{tpu_custom_call.1} parent=1 // pred_check
      _
    $region15: #{tpu_custom_call.1} parent=1 // pred_check_branch
      %48 = sbr.rel (0) target = $region17
    $region16: #{tpu_custom_call.1} parent=1 // pred_region
      %s50 = ssub.s32 6144, 6144
      %51 = vsyncadd [#allocation9], %s50
      %s52 = sshll.u32 [#allocation8], 4
      %s53 = int_to_ptr.vmem [resolvable:$true] %s52
      %58 = dma.hbm_to_vmem [thread:$0]  %s3, 6144, %s53, [#allocation9], 384, 384, 24
    $region17: #{tpu_custom_call.1} parent=1 // pred_fallthru
      _
    // Predicated region
    $region18: #{tpu_custom_call.1} parent=1 // pred_check
      _
    $region19: #{tpu_custom_call.1} parent=1 // pred_check_branch
      %60 = sbr.rel (0) target = $region21
    $region20: #{tpu_custom_call.1} parent=1 // pred_region
      %s62 = ssub.s32 2048, 2048
      %63 = vsyncadd [#allocation9], %s62
      %s64 = sshll.u32 [#allocation10], 4
      %s65 = int_to_ptr.vmem [resolvable:$true] %s64
      %70 = dma.hbm_to_vmem [thread:$0]  %s4, 2048, %s65, [#allocation9], 64, 64, 4
    $region21: #{tpu_custom_call.1} parent=1 // pred_fallthru
      _
    // Predicated region
    $region22: #{tpu_custom_call.1} parent=1 // pred_check
      _
    $region23: #{tpu_custom_call.1} parent=1 // pred_check_branch
      %72 = sbr.rel (0) target = $region25
    $region24: #{tpu_custom_call.1} parent=1 // pred_region
      _
    $region25: #{tpu_custom_call.1} parent=1 // pred_fallthru
      _
    // Predicated region
    $region26: #{tpu_custom_call.1} parent=1 // pred_check
      _
    $region27: #{tpu_custom_call.1} parent=1 // pred_check_branch
      %74 = sbr.rel (0) target = $region29
    $region28: #{tpu_custom_call.1} parent=1 // pred_region
      %75 = dma.done [#allocation3], 384
    $region29: #{tpu_custom_call.1} parent=1 // pred_fallthru
      _
    // Predicated region
    $region30: #{tpu_custom_call.1} parent=1 // pred_check
      _
    $region31: #{tpu_custom_call.1} parent=1 // pred_check_branch
      %77 = sbr.rel (0) target = $region33
    $region32: #{tpu_custom_call.1} parent=1 // pred_region
      %78 = dma.done [#allocation6], 384
    $region33: #{tpu_custom_call.1} parent=1 // pred_fallthru
      _
    // Predicated region
    $region34: #{tpu_custom_call.1} parent=1 // pred_check
      _
    $region35: #{tpu_custom_call.1} parent=1 // pred_check_branch
      %80 = sbr.rel (0) target = $region37
    $region36: #{tpu_custom_call.1} parent=1 // pred_region
      %81 = dma.done [#allocation6], 6144
    $region37: #{tpu_custom_call.1} parent=1 // pred_fallthru
      _
    // Predicated region
    $region38: #{tpu_custom_call.1} parent=1 // pred_check
      _
    $region39: #{tpu_custom_call.1} parent=1 // pred_check_branch
      %83 = sbr.rel (0) target = $region41
    $region40: #{tpu_custom_call.1} parent=1 // pred_region
      %84 = dma.done [#allocation9], 6144
    $region41: #{tpu_custom_call.1} parent=1 // pred_fallthru
      _
    // Predicated region
    $region42: #{tpu_custom_call.1} parent=1 // pred_check
      _
    $region43: #{tpu_custom_call.1} parent=1 // pred_check_branch
      %86 = sbr.rel (0) target = $region45
    $region44: #{tpu_custom_call.1} parent=1 // pred_region
      %87 = dma.done [#allocation9], 2048
    $region45: #{tpu_custom_call.1} parent=1 // pred_fallthru
      _
    %v89 = vld [vmem:[%s5] sm:$0x1]
    %v90 = vld [vmem:[%s5 + $0x1] sm:$0x7]
    %v91 = vld [vmem:[%s5 + $0x4] sm:$0x1]
    %v92 = vld [vmem:[%s5 + $0x5] sm:$0x1]
    %v93 = vld [vmem:[#allocation7] sm:$0xf]
    %v94 = vld [vmem:[#allocation7 + $0x4] sm:$0xf]
    %v95 = vld [vmem:[#allocation7 + $0x8] sm:$0xf]
    %v96 = vld [vmem:[#allocation7 + $0xc] sm:$0xf]
    %v97 = vld [vmem:[#allocation7 + $0x10] sm:$0xf]
    %v98 = vld [vmem:[#allocation7 + $0x14] sm:$0xf]
    %v99 = vld [vmem:[#allocation7 + $0x18] sm:$0xf]
    %v100 = vld [vmem:[#allocation7 + $0x1c] sm:$0xf]
    %v101 = vld [vmem:[#allocation7 + $0x20] sm:$0xf]
    %v102 = vld [vmem:[#allocation7 + $0x24] sm:$0xf]
    %v103 = vld [vmem:[#allocation7 + $0x28] sm:$0xf]
    %v104 = vld [vmem:[#allocation7 + $0x2c] sm:$0xf]
    %v105 = vld [vmem:[#allocation7 + $0x30] sm:$0xf]
    %v106 = vld [vmem:[#allocation7 + $0x34] sm:$0xf]
    %v107 = vld [vmem:[#allocation7 + $0x38] sm:$0xf]
    %v108 = vld [vmem:[#allocation7 + $0x3c] sm:$0xf]
    %v109 = vld [vmem:[#allocation7 + $0x40] sm:$0xf]
    %v110 = vld [vmem:[#allocation7 + $0x44] sm:$0xf]
    %v111 = vld [vmem:[#allocation7 + $0x48] sm:$0xf]
    %v112 = vld [vmem:[#allocation7 + $0x4c] sm:$0xf]
    %v113 = vld [vmem:[#allocation7 + $0x50] sm:$0xf]
    %v114 = vld [vmem:[#allocation7 + $0x54] sm:$0xf]
    %v115 = vld [vmem:[#allocation7 + $0x58] sm:$0xf]
    %v116 = vld [vmem:[#allocation7 + $0x5c] sm:$0xf]
    %v117 = vld [vmem:[#allocation7 + $0x60] sm:$0xf]
    %v118 = vld [vmem:[#allocation7 + $0x64] sm:$0xf]
    %v119 = vld [vmem:[#allocation7 + $0x68] sm:$0xf]
    %v120 = vld [vmem:[#allocation7 + $0x6c] sm:$0xf]
    %v121 = vld [vmem:[#allocation7 + $0x70] sm:$0xf]
    %v122 = vld [vmem:[#allocation7 + $0x74] sm:$0xf]
    %v123 = vld [vmem:[#allocation7 + $0x78] sm:$0xf]
    %v124 = vld [vmem:[#allocation7 + $0x7c] sm:$0xf]
    %v125 = vld [vmem:[#allocation7 + $0x80] sm:$0xf]
    %v126 = vld [vmem:[#allocation7 + $0x84] sm:$0xf]
    %v127 = vld [vmem:[#allocation7 + $0x88] sm:$0xf]
    %v128 = vld [vmem:[#allocation7 + $0x8c] sm:$0xf]
    %v129 = vld [vmem:[#allocation7 + $0x90] sm:$0xf]
    %v130 = vld [vmem:[#allocation7 + $0x94] sm:$0xf]
    %v131 = vld [vmem:[#allocation7 + $0x98] sm:$0xf]
    %v132 = vld [vmem:[#allocation7 + $0x9c] sm:$0xf]
    %v133 = vld [vmem:[#allocation7 + $0xa0] sm:$0xf]
    %v134 = vld [vmem:[#allocation7 + $0xa4] sm:$0xf]
    %v135 = vld [vmem:[#allocation7 + $0xa8] sm:$0xf]
    %v136 = vld [vmem:[#allocation7 + $0xac] sm:$0xf]
    %v137 = vld [vmem:[#allocation7 + $0xb0] sm:$0xf]
    %v138 = vld [vmem:[#allocation7 + $0xb4] sm:$0xf]
    %v139 = vld [vmem:[#allocation7 + $0xb8] sm:$0xf]
    %v140 = vld [vmem:[#allocation7 + $0xbc] sm:$0xf]
    %v141 = vld [vmem:[#allocation7 + $0xc0] sm:$0xf]
    %v142 = vld [vmem:[#allocation7 + $0xc4] sm:$0xf]
    %v143 = vld [vmem:[#allocation7 + $0xc8] sm:$0xf]
    %v144 = vld [vmem:[#allocation7 + $0xcc] sm:$0xf]
    %v145 = vld [vmem:[#allocation7 + $0xd0] sm:$0xf]
    %v146 = vld [vmem:[#allocation7 + $0xd4] sm:$0xf]
    %v147 = vld [vmem:[#allocation7 + $0xd8] sm:$0xf]
    %v148 = vld [vmem:[#allocation7 + $0xdc] sm:$0xf]
    %v149 = vld [vmem:[#allocation7 + $0xe0] sm:$0xf]
    %v150 = vld [vmem:[#allocation7 + $0xe4] sm:$0xf]
    %v151 = vld [vmem:[#allocation7 + $0xe8] sm:$0xf]
    %v152 = vld [vmem:[#allocation7 + $0xec] sm:$0xf]
    %v153 = vld [vmem:[#allocation7 + $0xf0] sm:$0xf]
    %v154 = vld [vmem:[#allocation7 + $0xf4] sm:$0xf]
    %v155 = vld [vmem:[#allocation7 + $0xf8] sm:$0xf]
    %v156 = vld [vmem:[#allocation7 + $0xfc] sm:$0xf]
    %v157 = vld [vmem:[#allocation7 + $0x100] sm:$0xf]
    %v158 = vld [vmem:[#allocation7 + $0x104] sm:$0xf]
    %v159 = vld [vmem:[#allocation7 + $0x108] sm:$0xf]
    %v160 = vld [vmem:[#allocation7 + $0x10c] sm:$0xf]
    %v161 = vld [vmem:[#allocation7 + $0x110] sm:$0xf]
    %v162 = vld [vmem:[#allocation7 + $0x114] sm:$0xf]
    %v163 = vld [vmem:[#allocation7 + $0x118] sm:$0xf]
    %v164 = vld [vmem:[#allocation7 + $0x11c] sm:$0xf]
    %v165 = vld [vmem:[#allocation7 + $0x120] sm:$0xf]
    %v166 = vld [vmem:[#allocation7 + $0x124] sm:$0xf]
    %v167 = vld [vmem:[#allocation7 + $0x128] sm:$0xf]
    %v168 = vld [vmem:[#allocation7 + $0x12c] sm:$0xf]
    %v169 = vld [vmem:[#allocation7 + $0x130] sm:$0xf]
    %v170 = vld [vmem:[#allocation7 + $0x134] sm:$0xf]
    %v171 = vld [vmem:[#allocation7 + $0x138] sm:$0xf]
    %v172 = vld [vmem:[#allocation7 + $0x13c] sm:$0xf]
    %v173 = vld [vmem:[#allocation7 + $0x140] sm:$0xf]
    %v174 = vld [vmem:[#allocation7 + $0x144] sm:$0xf]
    %v175 = vld [vmem:[#allocation7 + $0x148] sm:$0xf]
    %v176 = vld [vmem:[#allocation7 + $0x14c] sm:$0xf]
    %v177 = vld [vmem:[#allocation7 + $0x150] sm:$0xf]
    %v178 = vld [vmem:[#allocation7 + $0x154] sm:$0xf]
    %v179 = vld [vmem:[#allocation7 + $0x158] sm:$0xf]
    %v180 = vld [vmem:[#allocation7 + $0x15c] sm:$0xf]
    %v181 = vld [vmem:[#allocation7 + $0x160] sm:$0xf]
    %v182 = vld [vmem:[#allocation7 + $0x164] sm:$0xf]
    %v183 = vld [vmem:[#allocation7 + $0x168] sm:$0xf]
    %v184 = vld [vmem:[#allocation7 + $0x16c] sm:$0xf]
    %v185 = vld [vmem:[#allocation7 + $0x170] sm:$0xf]
    %v186 = vld [vmem:[#allocation7 + $0x174] sm:$0xf]
    %v187 = vld [vmem:[#allocation7 + $0x178] sm:$0xf]
    %v188 = vld [vmem:[#allocation7 + $0x17c] sm:$0xf]
    %v189 = vld [vmem:[#allocation8] sm:$0xff]
    %v190 = vld [vmem:[#allocation8 + $0x8] sm:$0xf]
    %v191 = vld [vmem:[#allocation8 + $0x18] sm:$0xff]
    %v192 = vld [vmem:[#allocation8 + $0x20] sm:$0xf]
    %v193 = vld [vmem:[#allocation8 + $0x30] sm:$0xff]
    %v194 = vld [vmem:[#allocation8 + $0x38] sm:$0xf]
    %v195 = vld [vmem:[#allocation8 + $0x48] sm:$0xff]
    %v196 = vld [vmem:[#allocation8 + $0x50] sm:$0xf]
    %v197 = vld [vmem:[#allocation8 + $0x60] sm:$0xff]
    %v198 = vld [vmem:[#allocation8 + $0x68] sm:$0xf]
    %v199 = vld [vmem:[#allocation8 + $0x78] sm:$0xff]
    %v200 = vld [vmem:[#allocation8 + $0x80] sm:$0xf]
    %v201 = vld [vmem:[#allocation8 + $0x90] sm:$0xff]
    %v202 = vld [vmem:[#allocation8 + $0x98] sm:$0xf]
    %v203 = vld [vmem:[#allocation8 + $0xa8] sm:$0xff]
    %v204 = vld [vmem:[#allocation8 + $0xb0] sm:$0xf]
    %v205 = vld [vmem:[#allocation8 + $0xc0] sm:$0xff]
    %v206 = vld [vmem:[#allocation8 + $0xc8] sm:$0xf]
    %v207 = vld [vmem:[#allocation8 + $0xd8] sm:$0xff]
    %v208 = vld [vmem:[#allocation8 + $0xe0] sm:$0xf]
    %v209 = vld [vmem:[#allocation8 + $0xf0] sm:$0xff]
    %v210 = vld [vmem:[#allocation8 + $0xf8] sm:$0xf]
    %v211 = vld [vmem:[#allocation8 + $0x108] sm:$0xff]
    %v212 = vld [vmem:[#allocation8 + $0x110] sm:$0xf]
    %v213 = vld [vmem:[#allocation8 + $0x120] sm:$0xff]
    %v214 = vld [vmem:[#allocation8 + $0x128] sm:$0xf]
    %v215 = vld [vmem:[#allocation8 + $0x138] sm:$0xff]
    %v216 = vld [vmem:[#allocation8 + $0x140] sm:$0xf]
    %v217 = vld [vmem:[#allocation8 + $0x150] sm:$0xff]
    %v218 = vld [vmem:[#allocation8 + $0x158] sm:$0xf]
    %v219 = vld [vmem:[#allocation8 + $0x168] sm:$0xff]
    %v220 = vld [vmem:[#allocation8 + $0x170] sm:$0xf]
    %v221 = vld [vmem:[#allocation8 + $0xc] sm:$0xf]
    %v222 = vld [vmem:[#allocation8 + $0x24] sm:$0xf]
    %v223 = vld [vmem:[#allocation8 + $0x3c] sm:$0xf]
    %v224 = vld [vmem:[#allocation8 + $0x54] sm:$0xf]
    %v225 = vld [vmem:[#allocation8 + $0x6c] sm:$0xf]
    %v226 = vld [vmem:[#allocation8 + $0x84] sm:$0xf]
    %v227 = vld [vmem:[#allocation8 + $0x9c] sm:$0xf]
    %v228 = vld [vmem:[#allocation8 + $0xb4] sm:$0xf]
    %v229 = vld [vmem:[#allocation8 + $0xcc] sm:$0xf]
    %v230 = vld [vmem:[#allocation8 + $0xe4] sm:$0xf]
    %v231 = vld [vmem:[#allocation8 + $0xfc] sm:$0xf]
    %v232 = vld [vmem:[#allocation8 + $0x114] sm:$0xf]
    %v233 = vld [vmem:[#allocation8 + $0x12c] sm:$0xf]
    %v234 = vld [vmem:[#allocation8 + $0x144] sm:$0xf]
    %v235 = vld [vmem:[#allocation8 + $0x15c] sm:$0xf]
    %v236 = vld [vmem:[#allocation8 + $0x174] sm:$0xf]
    %v237 = vld [vmem:[#allocation8 + $0x10] sm:$0xf]
    %v238 = vld [vmem:[#allocation8 + $0x28] sm:$0xf]
    %v239 = vld [vmem:[#allocation8 + $0x40] sm:$0xf]
    %v240 = vld [vmem:[#allocation8 + $0x58] sm:$0xf]
    %v241 = vld [vmem:[#allocation8 + $0x70] sm:$0xf]
    %v242 = vld [vmem:[#allocation8 + $0x88] sm:$0xf]
    %v243 = vld [vmem:[#allocation8 + $0xa0] sm:$0xf]
    %v244 = vld [vmem:[#allocation8 + $0xb8] sm:$0xf]
    %v245 = vld [vmem:[#allocation8 + $0xd0] sm:$0xf]
    %v246 = vld [vmem:[#allocation8 + $0xe8] sm:$0xf]
    %v247 = vld [vmem:[#allocation8 + $0x100] sm:$0xf]
    %v248 = vld [vmem:[#allocation8 + $0x118] sm:$0xf]
    %v249 = vld [vmem:[#allocation8 + $0x130] sm:$0xf]
    %v250 = vld [vmem:[#allocation8 + $0x148] sm:$0xf]
    %v251 = vld [vmem:[#allocation8 + $0x160] sm:$0xf]
    %v252 = vld [vmem:[#allocation8 + $0x178] sm:$0xf]
    %v253 = vld [vmem:[#allocation8 + $0x14] sm:$0xf]
    %v254 = vld [vmem:[#allocation8 + $0x2c] sm:$0xf]
    %v255 = vld [vmem:[#allocation8 + $0x44] sm:$0xf]
    %v256 = vld [vmem:[#allocation8 + $0x5c] sm:$0xf]
    %v257 = vld [vmem:[#allocation8 + $0x74] sm:$0xf]
    %v258 = vld [vmem:[#allocation8 + $0x8c] sm:$0xf]
    %v259 = vld [vmem:[#allocation8 + $0xa4] sm:$0xf]
    %v260 = vld [vmem:[#allocation8 + $0xbc] sm:$0xf]
    %v261 = vld [vmem:[#allocation8 + $0xd4] sm:$0xf]
    %v262 = vld [vmem:[#allocation8 + $0xec] sm:$0xf]
    %v263 = vld [vmem:[#allocation8 + $0x104] sm:$0xf]
    %v264 = vld [vmem:[#allocation8 + $0x11c] sm:$0xf]
    %v265 = vld [vmem:[#allocation8 + $0x134] sm:$0xf]
    %v266 = vld [vmem:[#allocation8 + $0x14c] sm:$0xf]
    %v267 = vld [vmem:[#allocation8 + $0x164] sm:$0xf]
    %v268 = vld [vmem:[#allocation8 + $0x17c] sm:$0xf]
    %v269 = vld [vmem:[#allocation2] sm:$0xff]
    %v270 = vld [vmem:[#allocation2 + $0x8] sm:$0xff]
    %v271 = vld [vmem:[#allocation2 + $0x10] sm:$0xff]
    %v273 = vlaneseq
    %v274 = vshrl.u32 %v273, 7
    %v275 = vsub.s32 0, %v274
    %v276 = vrot.slane %v89, %v275
    %v281 = vunpack.c.l.b16 %v269
    %v282 = vunpack.c.h.b16 %v269
    %v283 = vunpack.c.l.b16 %v270
    %v284 = vunpack.c.h.b16 %v270
    %v285 = vunpack.c.l.b16 %v271
    %v286 = vunpack.c.h.b16 %v271
    %v287 = vpack.c.b16 %v281, %v281
    %v288 = vpack.c.b16 %v282, %v282
    %v289 = vpack.c.b16 %v283, %v283
    %v290 = vpack.c.b16 %v284, %v284
    %v291 = vpack.c.b16 %v285, %v285
    %v292 = vpack.c.b16 %v286, %v286
    %v395 = vunpack.c.l.b16 %v93
    %v396 = vunpack.c.l.b16 %v94
    %v397 = vunpack.c.l.b16 %v95
    %v398 = vunpack.c.l.b16 %v96
    %v399 = vunpack.c.l.b16 %v97
    %v400 = vunpack.c.l.b16 %v98
    %v401 = vunpack.c.l.b16 %v99
    %v402 = vunpack.c.l.b16 %v100
    %v403 = vunpack.c.l.b16 %v101
    %v404 = vunpack.c.l.b16 %v102
    %v405 = vunpack.c.l.b16 %v103
    %v406 = vunpack.c.l.b16 %v104
    %v407 = vunpack.c.l.b16 %v105
    %v408 = vunpack.c.l.b16 %v106
    %v409 = vunpack.c.l.b16 %v107
    %v410 = vunpack.c.l.b16 %v108
    %v411 = vunpack.c.l.b16 %v109
    %v412 = vunpack.c.l.b16 %v110
    %v413 = vunpack.c.l.b16 %v111
    %v414 = vunpack.c.l.b16 %v112
    %v415 = vunpack.c.l.b16 %v113
    %v416 = vunpack.c.l.b16 %v114
    %v417 = vunpack.c.l.b16 %v115
    %v418 = vunpack.c.l.b16 %v116
    %v419 = vunpack.c.l.b16 %v117
    %v420 = vunpack.c.l.b16 %v118
    %v421 = vunpack.c.l.b16 %v119
    %v422 = vunpack.c.l.b16 %v120
    %v423 = vunpack.c.l.b16 %v121
    %v424 = vunpack.c.l.b16 %v122
    %v425 = vunpack.c.l.b16 %v123
    %v426 = vunpack.c.l.b16 %v124
    %v427 = vunpack.c.l.b16 %v125
    %v428 = vunpack.c.l.b16 %v126
    %v429 = vunpack.c.l.b16 %v127
    %v430 = vunpack.c.l.b16 %v128
    %v431 = vunpack.c.l.b16 %v129
    %v432 = vunpack.c.l.b16 %v130
    %v433 = vunpack.c.l.b16 %v131
    %v434 = vunpack.c.l.b16 %v132
    %v435 = vunpack.c.l.b16 %v133
    %v436 = vunpack.c.l.b16 %v134
    %v437 = vunpack.c.l.b16 %v135
    %v438 = vunpack.c.l.b16 %v136
    %v439 = vunpack.c.l.b16 %v137
    %v440 = vunpack.c.l.b16 %v138
    %v441 = vunpack.c.l.b16 %v139
    %v442 = vunpack.c.l.b16 %v140
    %v443 = vunpack.c.l.b16 %v141
    %v444 = vunpack.c.l.b16 %v142
    %v445 = vunpack.c.l.b16 %v143
    %v446 = vunpack.c.l.b16 %v144
    %v447 = vunpack.c.l.b16 %v145
    %v448 = vunpack.c.l.b16 %v146
    %v449 = vunpack.c.l.b16 %v147
    %v450 = vunpack.c.l.b16 %v148
    %v451 = vunpack.c.l.b16 %v149
    %v452 = vunpack.c.l.b16 %v150
    %v453 = vunpack.c.l.b16 %v151
    %v454 = vunpack.c.l.b16 %v152
    %v455 = vunpack.c.l.b16 %v153
    %v456 = vunpack.c.l.b16 %v154
    %v457 = vunpack.c.l.b16 %v155
    %v458 = vunpack.c.l.b16 %v156
    %v459 = vunpack.c.l.b16 %v157
    %v460 = vunpack.c.l.b16 %v158
    %v461 = vunpack.c.l.b16 %v159
    %v462 = vunpack.c.l.b16 %v160
    %v463 = vunpack.c.l.b16 %v161
    %v464 = vunpack.c.l.b16 %v162
    %v465 = vunpack.c.l.b16 %v163
    %v466 = vunpack.c.l.b16 %v164
    %v467 = vunpack.c.l.b16 %v165
    %v468 = vunpack.c.l.b16 %v166
    %v469 = vunpack.c.l.b16 %v167
    %v470 = vunpack.c.l.b16 %v168
    %v471 = vunpack.c.l.b16 %v169
    %v472 = vunpack.c.l.b16 %v170
    %v473 = vunpack.c.l.b16 %v171
    %v474 = vunpack.c.l.b16 %v172
    %v475 = vunpack.c.l.b16 %v173
    %v476 = vunpack.c.l.b16 %v174
    %v477 = vunpack.c.l.b16 %v175
    %v478 = vunpack.c.l.b16 %v176
    %v479 = vunpack.c.l.b16 %v177
    %v480 = vunpack.c.l.b16 %v178
    %v481 = vunpack.c.l.b16 %v179
    %v482 = vunpack.c.l.b16 %v180
    %v483 = vunpack.c.l.b16 %v181
    %v484 = vunpack.c.l.b16 %v182
    %v485 = vunpack.c.l.b16 %v183
    %v486 = vunpack.c.l.b16 %v184
    %v487 = vunpack.c.l.b16 %v185
    %v488 = vunpack.c.l.b16 %v186
    %v489 = vunpack.c.l.b16 %v187
    %v490 = vunpack.c.l.b16 %v188
    %v491 = vpack.c.b16 %v396, %v395
    %v492 = vpack.c.b16 %v398, %v397
    %v493 = vpack.c.b16 %v400, %v399
    %v494 = vpack.c.b16 %v402, %v401
    %v495 = vpack.c.b16 %v404, %v403
    %v496 = vpack.c.b16 %v406, %v405
    %v497 = vpack.c.b16 %v408, %v407
    %v498 = vpack.c.b16 %v410, %v409
    %v499 = vpack.c.b16 %v412, %v411
    %v500 = vpack.c.b16 %v414, %v413
    %v501 = vpack.c.b16 %v416, %v415
    %v502 = vpack.c.b16 %v418, %v417
    %v503 = vpack.c.b16 %v420, %v419
    %v504 = vpack.c.b16 %v422, %v421
    %v505 = vpack.c.b16 %v424, %v423
    %v506 = vpack.c.b16 %v426, %v425
    %v507 = vpack.c.b16 %v428, %v427
    %v508 = vpack.c.b16 %v430, %v429
    %v509 = vpack.c.b16 %v432, %v431
    %v510 = vpack.c.b16 %v434, %v433
    %v511 = vpack.c.b16 %v436, %v435
    %v512 = vpack.c.b16 %v438, %v437
    %v513 = vpack.c.b16 %v440, %v439
    %v514 = vpack.c.b16 %v442, %v441
    %v515 = vpack.c.b16 %v444, %v443
    %v516 = vpack.c.b16 %v446, %v445
    %v517 = vpack.c.b16 %v448, %v447
    %v518 = vpack.c.b16 %v450, %v449
    %v519 = vpack.c.b16 %v452, %v451
    %v520 = vpack.c.b16 %v454, %v453
    %v521 = vpack.c.b16 %v456, %v455
    %v522 = vpack.c.b16 %v458, %v457
    %v523 = vpack.c.b16 %v460, %v459
    %v524 = vpack.c.b16 %v462, %v461
    %v525 = vpack.c.b16 %v464, %v463
    %v526 = vpack.c.b16 %v466, %v465
    %v527 = vpack.c.b16 %v468, %v467
    %v528 = vpack.c.b16 %v470, %v469
    %v529 = vpack.c.b16 %v472, %v471
    %v530 = vpack.c.b16 %v474, %v473
    %v531 = vpack.c.b16 %v476, %v475
    %v532 = vpack.c.b16 %v478, %v477
    %v533 = vpack.c.b16 %v480, %v479
    %v534 = vpack.c.b16 %v482, %v481
    %v535 = vpack.c.b16 %v484, %v483
    %v536 = vpack.c.b16 %v486, %v485
    %v537 = vpack.c.b16 %v488, %v487
    %v538 = vpack.c.b16 %v490, %v489
    %587 = vmatprep.subr.bf16.mxu0 0
    %588 = vmatpush1.bf16.msra.mxu0 %v491
    %589 = vmatprep.subr.bf16.mxu0 0
    %590 = vmatpush1.bf16.msra.mxu0 %v492
    %591 = vmatprep.subr.bf16.mxu0 0
    %592 = vmatpush1.bf16.msra.mxu0 %v493
    %593 = vmatprep.subr.bf16.mxu0 0
    %594 = vmatpush1.bf16.msra.mxu0 %v494
    %595 = vmatprep.subr.bf16.mxu0 0
    %596 = vmatpush1.bf16.msra.mxu0 %v495
    %597 = vmatprep.subr.bf16.mxu0 0
    %598 = vmatpush1.bf16.msra.mxu0 %v496
    %599 = vmatprep.subr.bf16.mxu0 0
    %600 = vmatpush1.bf16.msra.mxu0 %v497
    %601 = vmatprep.subr.bf16.mxu0 0
    %602 = vmatpush1.bf16.msra.mxu0 %v498
    %603 = vmatprep.subr.bf16.mxu0 0
    %604 = vmatpush1.bf16.msra.mxu0 %v499
    %605 = vmatprep.subr.bf16.mxu0 0
    %606 = vmatpush1.bf16.msra.mxu0 %v500
    %607 = vmatprep.subr.bf16.mxu0 0
    %608 = vmatpush1.bf16.msra.mxu0 %v501
    %609 = vmatprep.subr.bf16.mxu0 0
    %610 = vmatpush1.bf16.msra.mxu0 %v502
    %611 = vmatprep.subr.bf16.mxu0 0
    %612 = vmatpush1.bf16.msra.mxu0 %v503
    %613 = vmatprep.subr.bf16.mxu0 0
    %614 = vmatpush1.bf16.msra.mxu0 %v504
    %615 = vmatprep.subr.bf16.mxu0 0
    %616 = vmatpush1.bf16.msra.mxu0 %v505
    %617 = vmatprep.subr.bf16.mxu0 0
    %618 = vmatpush1.bf16.msra.mxu0 %v506
    %619 = vmatprep.mubr.bf16.mxu0 %v288
    %620 = vmatmul.mubr.bf16.gmra.mrb[0].mxu0 %v287
    %v621 = vpop.f32.mrb[0].mxu0
    %v622 = vadd.f32 %v276, %v621
    %v623 = vpop.f32.mrb[0].mxu0
    %v624 = vpop.f32.mrb[0].mxu0
    %v625 = vpop.f32.mrb[0].mxu0
    %626 = vdwg.mxu0
    %627 = vmatprep.subr.bf16.mxu0 0
    %628 = vmatpush1.bf16.msra.mxu0 %v507
    %629 = vmatprep.subr.bf16.mxu0 0
    %630 = vmatpush1.bf16.msra.mxu0 %v508
    %631 = vmatprep.subr.bf16.mxu0 0
    %632 = vmatpush1.bf16.msra.mxu0 %v509
    %633 = vmatprep.subr.bf16.mxu0 0
    %634 = vmatpush1.bf16.msra.mxu0 %v510
    %635 = vmatprep.subr.bf16.mxu0 0
    %636 = vmatpush1.bf16.msra.mxu0 %v511
    %637 = vmatprep.subr.bf16.mxu0 0
    %638 = vmatpush1.bf16.msra.mxu0 %v512
    %639 = vmatprep.subr.bf16.mxu0 0
    %640 = vmatpush1.bf16.msra.mxu0 %v513
    %641 = vmatprep.subr.bf16.mxu0 0
    %642 = vmatpush1.bf16.msra.mxu0 %v514
    %643 = vmatprep.subr.bf16.mxu0 0
    %644 = vmatpush1.bf16.msra.mxu0 %v515
    %645 = vmatprep.subr.bf16.mxu0 0
    %646 = vmatpush1.bf16.msra.mxu0 %v516
    %647 = vmatprep.subr.bf16.mxu0 0
    %648 = vmatpush1.bf16.msra.mxu0 %v517
    %649 = vmatprep.subr.bf16.mxu0 0
    %650 = vmatpush1.bf16.msra.mxu0 %v518
    %651 = vmatprep.subr.bf16.mxu0 0
    %652 = vmatpush1.bf16.msra.mxu0 %v519
    %653 = vmatprep.subr.bf16.mxu0 0
    %654 = vmatpush1.bf16.msra.mxu0 %v520
    %655 = vmatprep.subr.bf16.mxu0 0
    %656 = vmatpush1.bf16.msra.mxu0 %v521
    %657 = vmatprep.subr.bf16.mxu0 0
    %658 = vmatpush1.bf16.msra.mxu0 %v522
    %659 = vmatprep.mubr.bf16.mxu0 %v290
    %660 = vmatmul.mubr.bf16.gmra.mrb[0].mxu0 %v289
    %v661 = vpop.f32.mrb[0].mxu0
    %v662 = vadd.f32 %v622, %v661
    %v663 = vpop.f32.mrb[0].mxu0
    %v664 = vpop.f32.mrb[0].mxu0
    %v665 = vpop.f32.mrb[0].mxu0
    %666 = vdwg.mxu0
    %667 = vmatprep.subr.bf16.mxu0 0
    %668 = vmatpush1.bf16.msra.mxu0 %v523
    %669 = vmatprep.subr.bf16.mxu0 0
    %670 = vmatpush1.bf16.msra.mxu0 %v524
    %671 = vmatprep.subr.bf16.mxu0 0
    %672 = vmatpush1.bf16.msra.mxu0 %v525
    %673 = vmatprep.subr.bf16.mxu0 0
    %674 = vmatpush1.bf16.msra.mxu0 %v526
    %675 = vmatprep.subr.bf16.mxu0 0
    %676 = vmatpush1.bf16.msra.mxu0 %v527
    %677 = vmatprep.subr.bf16.mxu0 0
    %678 = vmatpush1.bf16.msra.mxu0 %v528
    %679 = vmatprep.subr.bf16.mxu0 0
    %680 = vmatpush1.bf16.msra.mxu0 %v529
    %681 = vmatprep.subr.bf16.mxu0 0
    %682 = vmatpush1.bf16.msra.mxu0 %v530
    %683 = vmatprep.subr.bf16.mxu0 0
    %684 = vmatpush1.bf16.msra.mxu0 %v531
    %685 = vmatprep.subr.bf16.mxu0 0
    %686 = vmatpush1.bf16.msra.mxu0 %v532
    %687 = vmatprep.subr.bf16.mxu0 0
    %688 = vmatpush1.bf16.msra.mxu0 %v533
    %689 = vmatprep.subr.bf16.mxu0 0
    %690 = vmatpush1.bf16.msra.mxu0 %v534
    %691 = vmatprep.subr.bf16.mxu0 0
    %692 = vmatpush1.bf16.msra.mxu0 %v535
    %693 = vmatprep.subr.bf16.mxu0 0
    %694 = vmatpush1.bf16.msra.mxu0 %v536
    %695 = vmatprep.subr.bf16.mxu0 0
    %696 = vmatpush1.bf16.msra.mxu0 %v537
    %697 = vmatprep.subr.bf16.mxu0 0
    %698 = vmatpush1.bf16.msra.mxu0 %v538
    %699 = vmatprep.mubr.bf16.mxu0 %v292
    %700 = vmatmul.mubr.bf16.gmra.mrb[0].mxu0 %v291
    %v701 = vpop.f32.mrb[0].mxu0
    %v702 = vadd.f32 %v662, %v701
    %v703 = vpop.f32.mrb[0].mxu0
    %v704 = vpop.f32.mrb[0].mxu0
    %v705 = vpop.f32.mrb[0].mxu0
    %706 = vdwg.mxu0
    %v707 = vpack.c.bf16 %v702, %v702
    %v708 = vld [vmem:[#allocation5] sm:$0xff]
    %v709 = vld [vmem:[#allocation5 + $0x8] sm:$0xff]
    %v710 = vld [vmem:[#allocation5 + $0x10] sm:$0xff]
    %v714 = vunpack.c.l.b16 %v708
    %v715 = vunpack.c.h.b16 %v708
    %v716 = vunpack.c.l.b16 %v709
    %v717 = vunpack.c.h.b16 %v709
    %v718 = vunpack.c.l.b16 %v710
    %v719 = vunpack.c.h.b16 %v710
    %v720 = vpack.c.b16 %v714, %v714
    %v721 = vpack.c.b16 %v715, %v715
    %v722 = vpack.c.b16 %v716, %v716
    %v723 = vpack.c.b16 %v717, %v717
    %v724 = vpack.c.b16 %v718, %v718
    %v725 = vpack.c.b16 %v719, %v719
    %732 = vmatprep.subr.bf16.mxu0 0
    %733 = vmatpush1.bf16.msra.mxu0 %v491
    %734 = vmatprep.subr.bf16.mxu0 0
    %735 = vmatpush1.bf16.msra.mxu0 %v492
    %736 = vmatprep.subr.bf16.mxu0 0
    %737 = vmatpush1.bf16.msra.mxu0 %v493
    %738 = vmatprep.subr.bf16.mxu0 0
    %739 = vmatpush1.bf16.msra.mxu0 %v494
    %740 = vmatprep.subr.bf16.mxu0 0
    %741 = vmatpush1.bf16.msra.mxu0 %v495
    %742 = vmatprep.subr.bf16.mxu0 0
    %743 = vmatpush1.bf16.msra.mxu0 %v496
    %744 = vmatprep.subr.bf16.mxu0 0
    %745 = vmatpush1.bf16.msra.mxu0 %v497
    %746 = vmatprep.subr.bf16.mxu0 0
    %747 = vmatpush1.bf16.msra.mxu0 %v498
    %748 = vmatprep.subr.bf16.mxu0 0
    %749 = vmatpush1.bf16.msra.mxu0 %v499
    %750 = vmatprep.subr.bf16.mxu0 0
    %751 = vmatpush1.bf16.msra.mxu0 %v500
    %752 = vmatprep.subr.bf16.mxu0 0
    %753 = vmatpush1.bf16.msra.mxu0 %v501
    %754 = vmatprep.subr.bf16.mxu0 0
    %755 = vmatpush1.bf16.msra.mxu0 %v502
    %756 = vmatprep.subr.bf16.mxu0 0
    %757 = vmatpush1.bf16.msra.mxu0 %v503
    %758 = vmatprep.subr.bf16.mxu0 0
    %759 = vmatpush1.bf16.msra.mxu0 %v504
    %760 = vmatprep.subr.bf16.mxu0 0
    %761 = vmatpush1.bf16.msra.mxu0 %v505
    %762 = vmatprep.subr.bf16.mxu0 0
    %763 = vmatpush1.bf16.msra.mxu0 %v506
    %764 = vmatprep.mubr.bf16.mxu0 %v721
    %765 = vmatmul.mubr.bf16.gmra.mrb[0].mxu0 %v720
    %v766 = vpop.f32.mrb[0].mxu0
    %v767 = vadd.f32 %v276, %v766
    %v768 = vpop.f32.mrb[0].mxu0
    %v769 = vpop.f32.mrb[0].mxu0
    %v770 = vpop.f32.mrb[0].mxu0
    %771 = vdwg.mxu0
    %772 = vmatprep.subr.bf16.mxu0 0
    %773 = vmatpush1.bf16.msra.mxu0 %v507
    %774 = vmatprep.subr.bf16.mxu0 0
    %775 = vmatpush1.bf16.msra.mxu0 %v508
    %776 = vmatprep.subr.bf16.mxu0 0
    %777 = vmatpush1.bf16.msra.mxu0 %v509
    %778 = vmatprep.subr.bf16.mxu0 0
    %779 = vmatpush1.bf16.msra.mxu0 %v510
    %780 = vmatprep.subr.bf16.mxu0 0
    %781 = vmatpush1.bf16.msra.mxu0 %v511
    %782 = vmatprep.subr.bf16.mxu0 0
    %783 = vmatpush1.bf16.msra.mxu0 %v512
    %784 = vmatprep.subr.bf16.mxu0 0
    %785 = vmatpush1.bf16.msra.mxu0 %v513
    %786 = vmatprep.subr.bf16.mxu0 0
    %787 = vmatpush1.bf16.msra.mxu0 %v514
    %788 = vmatprep.subr.bf16.mxu0 0
    %789 = vmatpush1.bf16.msra.mxu0 %v515
    %790 = vmatprep.subr.bf16.mxu0 0
    %791 = vmatpush1.bf16.msra.mxu0 %v516
    %792 = vmatprep.subr.bf16.mxu0 0
    %793 = vmatpush1.bf16.msra.mxu0 %v517
    %794 = vmatprep.subr.bf16.mxu0 0
    %795 = vmatpush1.bf16.msra.mxu0 %v518
    %796 = vmatprep.subr.bf16.mxu0 0
    %797 = vmatpush1.bf16.msra.mxu0 %v519
    %798 = vmatprep.subr.bf16.mxu0 0
    %799 = vmatpush1.bf16.msra.mxu0 %v520
    %800 = vmatprep.subr.bf16.mxu0 0
    %801 = vmatpush1.bf16.msra.mxu0 %v521
    %802 = vmatprep.subr.bf16.mxu0 0
    %803 = vmatpush1.bf16.msra.mxu0 %v522
    %804 = vmatprep.mubr.bf16.mxu0 %v723
    %805 = vmatmul.mubr.bf16.gmra.mrb[0].mxu0 %v722
    %v806 = vpop.f32.mrb[0].mxu0
    %v807 = vadd.f32 %v767, %v806
    %v808 = vpop.f32.mrb[0].mxu0
    %v809 = vpop.f32.mrb[0].mxu0
    %v810 = vpop.f32.mrb[0].mxu0
    %811 = vdwg.mxu0
    %812 = vmatprep.subr.bf16.mxu0 0
    %813 = vmatpush1.bf16.msra.mxu0 %v523
    %814 = vmatprep.subr.bf16.mxu0 0
    %815 = vmatpush1.bf16.msra.mxu0 %v524
    %816 = vmatprep.subr.bf16.mxu0 0
    %817 = vmatpush1.bf16.msra.mxu0 %v525
    %818 = vmatprep.subr.bf16.mxu0 0
    %819 = vmatpush1.bf16.msra.mxu0 %v526
    %820 = vmatprep.subr.bf16.mxu0 0
    %821 = vmatpush1.bf16.msra.mxu0 %v527
    %822 = vmatprep.subr.bf16.mxu0 0
    %823 = vmatpush1.bf16.msra.mxu0 %v528
    %824 = vmatprep.subr.bf16.mxu0 0
    %825 = vmatpush1.bf16.msra.mxu0 %v529
    %826 = vmatprep.subr.bf16.mxu0 0
    %827 = vmatpush1.bf16.msra.mxu0 %v530
    %828 = vmatprep.subr.bf16.mxu0 0
    %829 = vmatpush1.bf16.msra.mxu0 %v531
    %830 = vmatprep.subr.bf16.mxu0 0
    %831 = vmatpush1.bf16.msra.mxu0 %v532
    %832 = vmatprep.subr.bf16.mxu0 0
    %833 = vmatpush1.bf16.msra.mxu0 %v533
    %834 = vmatprep.subr.bf16.mxu0 0
    %835 = vmatpush1.bf16.msra.mxu0 %v534
    %836 = vmatprep.subr.bf16.mxu0 0
    %837 = vmatpush1.bf16.msra.mxu0 %v535
    %838 = vmatprep.subr.bf16.mxu0 0
    %839 = vmatpush1.bf16.msra.mxu0 %v536
    %840 = vmatprep.subr.bf16.mxu0 0
    %841 = vmatpush1.bf16.msra.mxu0 %v537
    %842 = vmatprep.subr.bf16.mxu0 0
    %843 = vmatpush1.bf16.msra.mxu0 %v538
    %844 = vmatprep.mubr.bf16.mxu0 %v725
    %845 = vmatmul.mubr.bf16.gmra.mrb[0].mxu0 %v724
    %v846 = vpop.f32.mrb[0].mxu0
    %v847 = vadd.f32 %v807, %v846
    %v848 = vpop.f32.mrb[0].mxu0
    %v849 = vpop.f32.mrb[0].mxu0
    %v850 = vpop.f32.mrb[0].mxu0
    %851 = vdwg.mxu0
    %v852 = vpack.c.bf16 %v847, %v847
    %v854 = vlaneseq
    %v855 = vshrl.u32 %v854, 7
    %v856 = vsub.s32 0, %v855
    %v857 = vrot.slane %v90, %v856
    %v858 = vlaneseq
    %v859 = vshrl.u32 %v858, 7
    %v860 = vsub.s32 1, %v859
    %v861 = vrot.slane %v90, %v860
    %v862 = vlaneseq
    %v863 = vshrl.u32 %v862, 7
    %v864 = vsub.s32 2, %v863
    %v865 = vrot.slane %v90, %v864
    %v901 = vunpack.c.l.b16 %v189
    %v902 = vunpack.c.h.b16 %v189
    %v903 = vunpack.c.l.b16 %v190
    %v904 = vunpack.c.l.b16 %v191
    %v905 = vunpack.c.h.b16 %v191
    %v906 = vunpack.c.l.b16 %v192
    %v907 = vunpack.c.l.b16 %v193
    %v908 = vunpack.c.h.b16 %v193
    %v909 = vunpack.c.l.b16 %v194
    %v910 = vunpack.c.l.b16 %v195
    %v911 = vunpack.c.h.b16 %v195
    %v912 = vunpack.c.l.b16 %v196
    %v913 = vunpack.c.l.b16 %v197
    %v914 = vunpack.c.h.b16 %v197
    %v915 = vunpack.c.l.b16 %v198
    %v916 = vunpack.c.l.b16 %v199
    %v917 = vunpack.c.h.b16 %v199
    %v918 = vunpack.c.l.b16 %v200
    %v919 = vunpack.c.l.b16 %v201
    %v920 = vunpack.c.h.b16 %v201
    %v921 = vunpack.c.l.b16 %v202
    %v922 = vunpack.c.l.b16 %v203
    %v923 = vunpack.c.h.b16 %v203
    %v924 = vunpack.c.l.b16 %v204
    %v925 = vunpack.c.l.b16 %v205
    %v926 = vunpack.c.h.b16 %v205
    %v927 = vunpack.c.l.b16 %v206
    %v928 = vunpack.c.l.b16 %v207
    %v929 = vunpack.c.h.b16 %v207
    %v930 = vunpack.c.l.b16 %v208
    %v931 = vunpack.c.l.b16 %v209
    %v932 = vunpack.c.h.b16 %v209
    %v933 = vunpack.c.l.b16 %v210
    %v934 = vunpack.c.l.b16 %v211
    %v935 = vunpack.c.h.b16 %v211
    %v936 = vunpack.c.l.b16 %v212
    %v937 = vunpack.c.l.b16 %v213
    %v938 = vunpack.c.h.b16 %v213
    %v939 = vunpack.c.l.b16 %v214
    %v940 = vunpack.c.l.b16 %v215
    %v941 = vunpack.c.h.b16 %v215
    %v942 = vunpack.c.l.b16 %v216
    %v943 = vunpack.c.l.b16 %v217
    %v944 = vunpack.c.h.b16 %v217
    %v945 = vunpack.c.l.b16 %v218
    %v946 = vunpack.c.l.b16 %v219
    %v947 = vunpack.c.h.b16 %v219
    %v948 = vunpack.c.l.b16 %v220
    %v949 = vpack.c.b16 %v904, %v901
    %v950 = vpack.c.b16 %v905, %v902
    %v951 = vpack.c.b16 %v906, %v903
    %v952 = vpack.c.b16 %v910, %v907
    %v953 = vpack.c.b16 %v911, %v908
    %v954 = vpack.c.b16 %v912, %v909
    %v955 = vpack.c.b16 %v916, %v913
    %v956 = vpack.c.b16 %v917, %v914
    %v957 = vpack.c.b16 %v918, %v915
    %v958 = vpack.c.b16 %v922, %v919
    %v959 = vpack.c.b16 %v923, %v920
    %v960 = vpack.c.b16 %v924, %v921
    %v961 = vpack.c.b16 %v928, %v925
    %v962 = vpack.c.b16 %v929, %v926
    %v963 = vpack.c.b16 %v930, %v927
    %v964 = vpack.c.b16 %v934, %v931
    %v965 = vpack.c.b16 %v935, %v932
    %v966 = vpack.c.b16 %v936, %v933
    %v967 = vpack.c.b16 %v940, %v937
    %v968 = vpack.c.b16 %v941, %v938
    %v969 = vpack.c.b16 %v942, %v939
    %v970 = vpack.c.b16 %v946, %v943
    %v971 = vpack.c.b16 %v947, %v944
    %v972 = vpack.c.b16 %v948, %v945
    %997 = vmatprep.subr.bf16.mxu0 %v950
    %998 = vmatpush1.bf16.msra.mxu0 %v949
    %999 = vmatprep.subr.bf16.mxu0 %v953
    %1000 = vmatpush1.bf16.msra.mxu0 %v952
    %1001 = vmatprep.subr.bf16.mxu0 %v956
    %1002 = vmatpush1.bf16.msra.mxu0 %v955
    %1003 = vmatprep.subr.bf16.mxu0 %v959
    %1004 = vmatpush1.bf16.msra.mxu0 %v958
    %1005 = vmatprep.subr.bf16.mxu0 %v962
    %1006 = vmatpush1.bf16.msra.mxu0 %v961
    %1007 = vmatprep.subr.bf16.mxu0 %v965
    %1008 = vmatpush1.bf16.msra.mxu0 %v964
    %1009 = vmatprep.subr.bf16.mxu0 %v968
    %1010 = vmatpush1.bf16.msra.mxu0 %v967
    %1011 = vmatprep.subr.bf16.mxu0 %v971
    %1012 = vmatpush1.bf16.msra.mxu0 %v970
    %1013 = vmatprep.subr.bf16.mxu0 0
    %1014 = vmatpush1.bf16.msra.mxu0 0
    %1015 = vmatprep.subr.bf16.mxu0 0
    %1016 = vmatpush1.bf16.msra.mxu0 0
    %1017 = vmatprep.subr.bf16.mxu0 0
    %1018 = vmatpush1.bf16.msra.mxu0 0
    %1019 = vmatprep.subr.bf16.mxu0 0
    %1020 = vmatpush1.bf16.msra.mxu0 0
    %1021 = vmatprep.subr.bf16.mxu0 0
    %1022 = vmatpush1.bf16.msra.mxu0 0
    %1023 = vmatprep.subr.bf16.mxu0 0
    %1024 = vmatpush1.bf16.msra.mxu0 0
    %1025 = vmatprep.subr.bf16.mxu0 0
    %1026 = vmatpush1.bf16.msra.mxu0 0
    %1027 = vmatprep.subr.bf16.mxu0 0
    %1028 = vmatpush1.bf16.msra.mxu0 0
    %1029 = vmatprep.mubr.bf16.mxu0 0
    %1030 = vmatmul.mubr.bf16.gmra.mrb[0].mxu0 %v707
    %v1031 = vpop.f32.mrb[0].mxu0
    %v1032 = vadd.f32 %v857, %v1031
    %v1033 = vpop.f32.mrb[0].mxu0
    %v1034 = vadd.f32 %v861, %v1033
    %v1035 = vpop.f32.mrb[0].mxu0
    %v1036 = vpop.f32.mrb[0].mxu0
    %1037 = vdwg.mxu0
    %1038 = vmatprep.subr.bf16.mxu0 0
    %1039 = vmatpush1.bf16.msra.mxu0 %v951
    %1040 = vmatprep.subr.bf16.mxu0 0
    %1041 = vmatpush1.bf16.msra.mxu0 %v954
    %1042 = vmatprep.subr.bf16.mxu0 0
    %1043 = vmatpush1.bf16.msra.mxu0 %v957
    %1044 = vmatprep.subr.bf16.mxu0 0
    %1045 = vmatpush1.bf16.msra.mxu0 %v960
    %1046 = vmatprep.subr.bf16.mxu0 0
    %1047 = vmatpush1.bf16.msra.mxu0 %v963
    %1048 = vmatprep.subr.bf16.mxu0 0
    %1049 = vmatpush1.bf16.msra.mxu0 %v966
    %1050 = vmatprep.subr.bf16.mxu0 0
    %1051 = vmatpush1.bf16.msra.mxu0 %v969
    %1052 = vmatprep.subr.bf16.mxu0 0
    %1053 = vmatpush1.bf16.msra.mxu0 %v972
    %1054 = vmatprep.subr.bf16.mxu0 0
    %1055 = vmatpush1.bf16.msra.mxu0 0
    %1056 = vmatprep.subr.bf16.mxu0 0
    %1057 = vmatpush1.bf16.msra.mxu0 0
    %1058 = vmatprep.subr.bf16.mxu0 0
    %1059 = vmatpush1.bf16.msra.mxu0 0
    %1060 = vmatprep.subr.bf16.mxu0 0
    %1061 = vmatpush1.bf16.msra.mxu0 0
    %1062 = vmatprep.subr.bf16.mxu0 0
    %1063 = vmatpush1.bf16.msra.mxu0 0
    %1064 = vmatprep.subr.bf16.mxu0 0
    %1065 = vmatpush1.bf16.msra.mxu0 0
    %1066 = vmatprep.subr.bf16.mxu0 0
    %1067 = vmatpush1.bf16.msra.mxu0 0
    %1068 = vmatprep.subr.bf16.mxu0 0
    %1069 = vmatpush1.bf16.msra.mxu0 0
    %1070 = vmatprep.mubr.bf16.mxu0 0
    %1071 = vmatmul.mubr.bf16.gmra.mrb[0].mxu0 %v707
    %v1072 = vpop.f32.mrb[0].mxu0
    %v1073 = vadd.f32 %v865, %v1072
    %v1074 = vpop.f32.mrb[0].mxu0
    %v1075 = vpop.f32.mrb[0].mxu0
    %v1076 = vpop.f32.mrb[0].mxu0
    %1077 = vdwg.mxu0
    %1078 = vmatprep.subr.bf16.mxu0 %v950
    %1079 = vmatpush1.bf16.msra.mxu0 %v949
    %1080 = vmatprep.subr.bf16.mxu0 %v953
    %1081 = vmatpush1.bf16.msra.mxu0 %v952
    %1082 = vmatprep.subr.bf16.mxu0 %v956
    %1083 = vmatpush1.bf16.msra.mxu0 %v955
    %1084 = vmatprep.subr.bf16.mxu0 %v959
    %1085 = vmatpush1.bf16.msra.mxu0 %v958
    %1086 = vmatprep.subr.bf16.mxu0 %v962
    %1087 = vmatpush1.bf16.msra.mxu0 %v961
    %1088 = vmatprep.subr.bf16.mxu0 %v965
    %1089 = vmatpush1.bf16.msra.mxu0 %v964
    %1090 = vmatprep.subr.bf16.mxu0 %v968
    %1091 = vmatpush1.bf16.msra.mxu0 %v967
    %1092 = vmatprep.subr.bf16.mxu0 %v971
    %1093 = vmatpush1.bf16.msra.mxu0 %v970
    %1094 = vmatprep.subr.bf16.mxu0 0
    %1095 = vmatpush1.bf16.msra.mxu0 0
    %1096 = vmatprep.subr.bf16.mxu0 0
    %1097 = vmatpush1.bf16.msra.mxu0 0
    %1098 = vmatprep.subr.bf16.mxu0 0
    %1099 = vmatpush1.bf16.msra.mxu0 0
    %1100 = vmatprep.subr.bf16.mxu0 0
    %1101 = vmatpush1.bf16.msra.mxu0 0
    %1102 = vmatprep.subr.bf16.mxu0 0
    %1103 = vmatpush1.bf16.msra.mxu0 0
    %1104 = vmatprep.subr.bf16.mxu0 0
    %1105 = vmatpush1.bf16.msra.mxu0 0
    %1106 = vmatprep.subr.bf16.mxu0 0
    %1107 = vmatpush1.bf16.msra.mxu0 0
    %1108 = vmatprep.subr.bf16.mxu0 0
    %1109 = vmatpush1.bf16.msra.mxu0 0
    %1110 = vmatprep.mubr.bf16.mxu0 0
    %1111 = vmatmul.mubr.bf16.gmra.mrb[0].mxu0 %v852
    %v1112 = vpop.f32.mrb[0].mxu0
    %v1113 = vadd.f32 %v857, %v1112
    %v1114 = vpop.f32.mrb[0].mxu0
    %v1115 = vadd.f32 %v861, %v1114
    %v1116 = vpop.f32.mrb[0].mxu0
    %v1117 = vpop.f32.mrb[0].mxu0
    %1118 = vdwg.mxu0
    %1119 = vmatprep.subr.bf16.mxu0 0
    %1120 = vmatpush1.bf16.msra.mxu0 %v951
    %1121 = vmatprep.subr.bf16.mxu0 0
    %1122 = vmatpush1.bf16.msra.mxu0 %v954
    %1123 = vmatprep.subr.bf16.mxu0 0
    %1124 = vmatpush1.bf16.msra.mxu0 %v957
    %1125 = vmatprep.subr.bf16.mxu0 0
    %1126 = vmatpush1.bf16.msra.mxu0 %v960
    %1127 = vmatprep.subr.bf16.mxu0 0
    %1128 = vmatpush1.bf16.msra.mxu0 %v963
    %1129 = vmatprep.subr.bf16.mxu0 0
    %1130 = vmatpush1.bf16.msra.mxu0 %v966
    %1131 = vmatprep.subr.bf16.mxu0 0
    %1132 = vmatpush1.bf16.msra.mxu0 %v969
    %1133 = vmatprep.subr.bf16.mxu0 0
    %1134 = vmatpush1.bf16.msra.mxu0 %v972
    %1135 = vmatprep.subr.bf16.mxu0 0
    %1136 = vmatpush1.bf16.msra.mxu0 0
    %1137 = vmatprep.subr.bf16.mxu0 0
    %1138 = vmatpush1.bf16.msra.mxu0 0
    %1139 = vmatprep.subr.bf16.mxu0 0
    %1140 = vmatpush1.bf16.msra.mxu0 0
    %1141 = vmatprep.subr.bf16.mxu0 0
    %1142 = vmatpush1.bf16.msra.mxu0 0
    %1143 = vmatprep.subr.bf16.mxu0 0
    %1144 = vmatpush1.bf16.msra.mxu0 0
    %1145 = vmatprep.subr.bf16.mxu0 0
    %1146 = vmatpush1.bf16.msra.mxu0 0
    %1147 = vmatprep.subr.bf16.mxu0 0
    %1148 = vmatpush1.bf16.msra.mxu0 0
    %1149 = vmatprep.subr.bf16.mxu0 0
    %1150 = vmatpush1.bf16.msra.mxu0 0
    %1151 = vmatprep.mubr.bf16.mxu0 0
    %1152 = vmatmul.mubr.bf16.gmra.mrb[0].mxu0 %v852
    %v1153 = vpop.f32.mrb[0].mxu0
    %v1154 = vadd.f32 %v865, %v1153
    %v1155 = vpop.f32.mrb[0].mxu0
    %v1156 = vpop.f32.mrb[0].mxu0
    %v1157 = vpop.f32.mrb[0].mxu0
    %1158 = vdwg.mxu0
    %v1159 = vmul.f32 %v1032, %v1034
    %v1160 = vpack.c.bf16 %v1159, %v1159
    %v1177 = vunpack.c.l.b16 %v221
    %v1178 = vunpack.c.l.b16 %v222
    %v1179 = vunpack.c.l.b16 %v223
    %v1180 = vunpack.c.l.b16 %v224
    %v1181 = vunpack.c.l.b16 %v225
    %v1182 = vunpack.c.l.b16 %v226
    %v1183 = vunpack.c.l.b16 %v227
    %v1184 = vunpack.c.l.b16 %v228
    %v1185 = vunpack.c.l.b16 %v229
    %v1186 = vunpack.c.l.b16 %v230
    %v1187 = vunpack.c.l.b16 %v231
    %v1188 = vunpack.c.l.b16 %v232
    %v1189 = vunpack.c.l.b16 %v233
    %v1190 = vunpack.c.l.b16 %v234
    %v1191 = vunpack.c.l.b16 %v235
    %v1192 = vunpack.c.l.b16 %v236
    %v1193 = vpack.c.b16 %v1178, %v1177
    %v1194 = vpack.c.b16 %v1180, %v1179
    %v1195 = vpack.c.b16 %v1182, %v1181
    %v1196 = vpack.c.b16 %v1184, %v1183
    %v1197 = vpack.c.b16 %v1186, %v1185
    %v1198 = vpack.c.b16 %v1188, %v1187
    %v1199 = vpack.c.b16 %v1190, %v1189
    %v1200 = vpack.c.b16 %v1192, %v1191
    %1209 = vmatprep.subr.bf16.mxu0 0
    %1210 = vmatpush1.bf16.msra.mxu0 %v1193
    %1211 = vmatprep.subr.bf16.mxu0 0
    %1212 = vmatpush1.bf16.msra.mxu0 %v1194
    %1213 = vmatprep.subr.bf16.mxu0 0
    %1214 = vmatpush1.bf16.msra.mxu0 %v1195
    %1215 = vmatprep.subr.bf16.mxu0 0
    %1216 = vmatpush1.bf16.msra.mxu0 %v1196
    %1217 = vmatprep.subr.bf16.mxu0 0
    %1218 = vmatpush1.bf16.msra.mxu0 %v1197
    %1219 = vmatprep.subr.bf16.mxu0 0
    %1220 = vmatpush1.bf16.msra.mxu0 %v1198
    %1221 = vmatprep.subr.bf16.mxu0 0
    %1222 = vmatpush1.bf16.msra.mxu0 %v1199
    %1223 = vmatprep.subr.bf16.mxu0 0
    %1224 = vmatpush1.bf16.msra.mxu0 %v1200
    %1225 = vmatprep.subr.bf16.mxu0 0
    %1226 = vmatpush1.bf16.msra.mxu0 0
    %1227 = vmatprep.subr.bf16.mxu0 0
    %1228 = vmatpush1.bf16.msra.mxu0 0
    %1229 = vmatprep.subr.bf16.mxu0 0
    %1230 = vmatpush1.bf16.msra.mxu0 0
    %1231 = vmatprep.subr.bf16.mxu0 0
    %1232 = vmatpush1.bf16.msra.mxu0 0
    %1233 = vmatprep.subr.bf16.mxu0 0
    %1234 = vmatpush1.bf16.msra.mxu0 0
    %1235 = vmatprep.subr.bf16.mxu0 0
    %1236 = vmatpush1.bf16.msra.mxu0 0
    %1237 = vmatprep.subr.bf16.mxu0 0
    %1238 = vmatpush1.bf16.msra.mxu0 0
    %1239 = vmatprep.subr.bf16.mxu0 0
    %1240 = vmatpush1.bf16.msra.mxu0 0
    %1241 = vmatprep.mubr.bf16.mxu0 0
    %1242 = vmatmul.mubr.bf16.gmra.mrb[0].mxu0 %v1160
    %v1243 = vpop.f32.mrb[0].mxu0
    %v1244 = vadd.f32 0.0, %v1243
    %v1245 = vpop.f32.mrb[0].mxu0
    %v1246 = vpop.f32.mrb[0].mxu0
    %v1247 = vpop.f32.mrb[0].mxu0
    %1248 = vdwg.mxu0
    %v1249 = vmul.f32 %v1032, %v1115
    %v1250 = vpack.c.bf16 %v1249, %v1249
    %1251 = vmatprep.subr.bf16.mxu0 0
    %1252 = vmatpush1.bf16.msra.mxu0 %v1193
    %1253 = vmatprep.subr.bf16.mxu0 0
    %1254 = vmatpush1.bf16.msra.mxu0 %v1194
    %1255 = vmatprep.subr.bf16.mxu0 0
    %1256 = vmatpush1.bf16.msra.mxu0 %v1195
    %1257 = vmatprep.subr.bf16.mxu0 0
    %1258 = vmatpush1.bf16.msra.mxu0 %v1196
    %1259 = vmatprep.subr.bf16.mxu0 0
    %1260 = vmatpush1.bf16.msra.mxu0 %v1197
    %1261 = vmatprep.subr.bf16.mxu0 0
    %1262 = vmatpush1.bf16.msra.mxu0 %v1198
    %1263 = vmatprep.subr.bf16.mxu0 0
    %1264 = vmatpush1.bf16.msra.mxu0 %v1199
    %1265 = vmatprep.subr.bf16.mxu0 0
    %1266 = vmatpush1.bf16.msra.mxu0 %v1200
    %1267 = vmatprep.subr.bf16.mxu0 0
    %1268 = vmatpush1.bf16.msra.mxu0 0
    %1269 = vmatprep.subr.bf16.mxu0 0
    %1270 = vmatpush1.bf16.msra.mxu0 0
    %1271 = vmatprep.subr.bf16.mxu0 0
    %1272 = vmatpush1.bf16.msra.mxu0 0
    %1273 = vmatprep.subr.bf16.mxu0 0
    %1274 = vmatpush1.bf16.msra.mxu0 0
    %1275 = vmatprep.subr.bf16.mxu0 0
    %1276 = vmatpush1.bf16.msra.mxu0 0
    %1277 = vmatprep.subr.bf16.mxu0 0
    %1278 = vmatpush1.bf16.msra.mxu0 0
    %1279 = vmatprep.subr.bf16.mxu0 0
    %1280 = vmatpush1.bf16.msra.mxu0 0
    %1281 = vmatprep.subr.bf16.mxu0 0
    %1282 = vmatpush1.bf16.msra.mxu0 0
    %1283 = vmatprep.mubr.bf16.mxu0 0
    %1284 = vmatmul.mubr.bf16.gmra.mrb[0].mxu0 %v1250
    %v1285 = vpop.f32.mrb[0].mxu0
    %v1286 = vadd.f32 0.0, %v1285
    %v1287 = vpop.f32.mrb[0].mxu0
    %v1288 = vpop.f32.mrb[0].mxu0
    %v1289 = vpop.f32.mrb[0].mxu0
    %1290 = vdwg.mxu0
    %v1291 = vmul.f32 %v1113, %v1034
    %v1292 = vpack.c.bf16 %v1291, %v1291
    %1293 = vmatprep.subr.bf16.mxu0 0
    %1294 = vmatpush1.bf16.msra.mxu0 %v1193
    %1295 = vmatprep.subr.bf16.mxu0 0
    %1296 = vmatpush1.bf16.msra.mxu0 %v1194
    %1297 = vmatprep.subr.bf16.mxu0 0
    %1298 = vmatpush1.bf16.msra.mxu0 %v1195
    %1299 = vmatprep.subr.bf16.mxu0 0
    %1300 = vmatpush1.bf16.msra.mxu0 %v1196
    %1301 = vmatprep.subr.bf16.mxu0 0
    %1302 = vmatpush1.bf16.msra.mxu0 %v1197
    %1303 = vmatprep.subr.bf16.mxu0 0
    %1304 = vmatpush1.bf16.msra.mxu0 %v1198
    %1305 = vmatprep.subr.bf16.mxu0 0
    %1306 = vmatpush1.bf16.msra.mxu0 %v1199
    %1307 = vmatprep.subr.bf16.mxu0 0
    %1308 = vmatpush1.bf16.msra.mxu0 %v1200
    %1309 = vmatprep.subr.bf16.mxu0 0
    %1310 = vmatpush1.bf16.msra.mxu0 0
    %1311 = vmatprep.subr.bf16.mxu0 0
    %1312 = vmatpush1.bf16.msra.mxu0 0
    %1313 = vmatprep.subr.bf16.mxu0 0
    %1314 = vmatpush1.bf16.msra.mxu0 0
    %1315 = vmatprep.subr.bf16.mxu0 0
    %1316 = vmatpush1.bf16.msra.mxu0 0
    %1317 = vmatprep.subr.bf16.mxu0 0
    %1318 = vmatpush1.bf16.msra.mxu0 0
    %1319 = vmatprep.subr.bf16.mxu0 0
    %1320 = vmatpush1.bf16.msra.mxu0 0
    %1321 = vmatprep.subr.bf16.mxu0 0
    %1322 = vmatpush1.bf16.msra.mxu0 0
    %1323 = vmatprep.subr.bf16.mxu0 0
    %1324 = vmatpush1.bf16.msra.mxu0 0
    %1325 = vmatprep.mubr.bf16.mxu0 0
    %1326 = vmatmul.mubr.bf16.gmra.mrb[0].mxu0 %v1292
    %v1327 = vpop.f32.mrb[0].mxu0
    %v1328 = vadd.f32 0.0, %v1327
    %v1329 = vpop.f32.mrb[0].mxu0
    %v1330 = vpop.f32.mrb[0].mxu0
    %v1331 = vpop.f32.mrb[0].mxu0
    %1332 = vdwg.mxu0
    %v1333 = vmul.f32 %v1113, %v1115
    %v1334 = vpack.c.bf16 %v1333, %v1333
    %1335 = vmatprep.subr.bf16.mxu0 0
    %1336 = vmatpush1.bf16.msra.mxu0 %v1193
    %1337 = vmatprep.subr.bf16.mxu0 0
    %1338 = vmatpush1.bf16.msra.mxu0 %v1194
    %1339 = vmatprep.subr.bf16.mxu0 0
    %1340 = vmatpush1.bf16.msra.mxu0 %v1195
    %1341 = vmatprep.subr.bf16.mxu0 0
    %1342 = vmatpush1.bf16.msra.mxu0 %v1196
    %1343 = vmatprep.subr.bf16.mxu0 0
    %1344 = vmatpush1.bf16.msra.mxu0 %v1197
    %1345 = vmatprep.subr.bf16.mxu0 0
    %1346 = vmatpush1.bf16.msra.mxu0 %v1198
    %1347 = vmatprep.subr.bf16.mxu0 0
    %1348 = vmatpush1.bf16.msra.mxu0 %v1199
    %1349 = vmatprep.subr.bf16.mxu0 0
    %1350 = vmatpush1.bf16.msra.mxu0 %v1200
    %1351 = vmatprep.subr.bf16.mxu0 0
    %1352 = vmatpush1.bf16.msra.mxu0 0
    %1353 = vmatprep.subr.bf16.mxu0 0
    %1354 = vmatpush1.bf16.msra.mxu0 0
    %1355 = vmatprep.subr.bf16.mxu0 0
    %1356 = vmatpush1.bf16.msra.mxu0 0
    %1357 = vmatprep.subr.bf16.mxu0 0
    %1358 = vmatpush1.bf16.msra.mxu0 0
    %1359 = vmatprep.subr.bf16.mxu0 0
    %1360 = vmatpush1.bf16.msra.mxu0 0
    %1361 = vmatprep.subr.bf16.mxu0 0
    %1362 = vmatpush1.bf16.msra.mxu0 0
    %1363 = vmatprep.subr.bf16.mxu0 0
    %1364 = vmatpush1.bf16.msra.mxu0 0
    %1365 = vmatprep.subr.bf16.mxu0 0
    %1366 = vmatpush1.bf16.msra.mxu0 0
    %1367 = vmatprep.mubr.bf16.mxu0 0
    %1368 = vmatmul.mubr.bf16.gmra.mrb[0].mxu0 %v1334
    %v1369 = vpop.f32.mrb[0].mxu0
    %v1370 = vadd.f32 0.0, %v1369
    %v1371 = vpop.f32.mrb[0].mxu0
    %v1372 = vpop.f32.mrb[0].mxu0
    %v1373 = vpop.f32.mrb[0].mxu0
    %1374 = vdwg.mxu0
    %v1375 = vmax.f32 %v1244, %v1286
    %v1376 = vsub.f32 %v1244, %v1375
    %v1377 = vmul.f32 %v1376, 1.442695
    %v1378 = vpow.pop %v1377
    %v1379 = vsub.f32 %v1286, %v1375
    %v1380 = vmul.f32 %v1379, 1.442695
    %v1381 = vpow.pop %v1380
    %v1382 = vadd.f32 %v1378, %v1381
    %v1383 = vrcp.pop %v1382
    %v1384 = vmax.f32 %v1328, %v1370
    %v1385 = vsub.f32 %v1328, %v1384
    %v1386 = vmul.f32 %v1385, 1.442695
    %v1387 = vpow.pop %v1386
    %v1388 = vsub.f32 %v1370, %v1384
    %v1389 = vmul.f32 %v1388, 1.442695
    %v1390 = vpow.pop %v1389
    %v1391 = vadd.f32 %v1387, %v1390
    %v1392 = vrcp.pop %v1391
    %v1393 = vmul.f32 %v1378, %v1383
    %v1394 = vpack.c.bf16 %v1393, %v1393
    %v1411 = vunpack.c.l.b16 %v237
    %v1412 = vunpack.c.l.b16 %v238
    %v1413 = vunpack.c.l.b16 %v239
    %v1414 = vunpack.c.l.b16 %v240
    %v1415 = vunpack.c.l.b16 %v241
    %v1416 = vunpack.c.l.b16 %v242
    %v1417 = vunpack.c.l.b16 %v243
    %v1418 = vunpack.c.l.b16 %v244
    %v1419 = vunpack.c.l.b16 %v245
    %v1420 = vunpack.c.l.b16 %v246
    %v1421 = vunpack.c.l.b16 %v247
    %v1422 = vunpack.c.l.b16 %v248
    %v1423 = vunpack.c.l.b16 %v249
    %v1424 = vunpack.c.l.b16 %v250
    %v1425 = vunpack.c.l.b16 %v251
    %v1426 = vunpack.c.l.b16 %v252
    %v1427 = vpack.c.b16 %v1412, %v1411
    %v1428 = vpack.c.b16 %v1414, %v1413
    %v1429 = vpack.c.b16 %v1416, %v1415
    %v1430 = vpack.c.b16 %v1418, %v1417
    %v1431 = vpack.c.b16 %v1420, %v1419
    %v1432 = vpack.c.b16 %v1422, %v1421
    %v1433 = vpack.c.b16 %v1424, %v1423
    %v1434 = vpack.c.b16 %v1426, %v1425
    %1443 = vmatprep.subr.bf16.mxu0 0
    %1444 = vmatpush1.bf16.msra.mxu0 %v1427
    %1445 = vmatprep.subr.bf16.mxu0 0
    %1446 = vmatpush1.bf16.msra.mxu0 %v1428
    %1447 = vmatprep.subr.bf16.mxu0 0
    %1448 = vmatpush1.bf16.msra.mxu0 %v1429
    %1449 = vmatprep.subr.bf16.mxu0 0
    %1450 = vmatpush1.bf16.msra.mxu0 %v1430
    %1451 = vmatprep.subr.bf16.mxu0 0
    %1452 = vmatpush1.bf16.msra.mxu0 %v1431
    %1453 = vmatprep.subr.bf16.mxu0 0
    %1454 = vmatpush1.bf16.msra.mxu0 %v1432
    %1455 = vmatprep.subr.bf16.mxu0 0
    %1456 = vmatpush1.bf16.msra.mxu0 %v1433
    %1457 = vmatprep.subr.bf16.mxu0 0
    %1458 = vmatpush1.bf16.msra.mxu0 %v1434
    %1459 = vmatprep.subr.bf16.mxu0 0
    %1460 = vmatpush1.bf16.msra.mxu0 0
    %1461 = vmatprep.subr.bf16.mxu0 0
    %1462 = vmatpush1.bf16.msra.mxu0 0
    %1463 = vmatprep.subr.bf16.mxu0 0
    %1464 = vmatpush1.bf16.msra.mxu0 0
    %1465 = vmatprep.subr.bf16.mxu0 0
    %1466 = vmatpush1.bf16.msra.mxu0 0
    %1467 = vmatprep.subr.bf16.mxu0 0
    %1468 = vmatpush1.bf16.msra.mxu0 0
    %1469 = vmatprep.subr.bf16.mxu0 0
    %1470 = vmatpush1.bf16.msra.mxu0 0
    %1471 = vmatprep.subr.bf16.mxu0 0
    %1472 = vmatpush1.bf16.msra.mxu0 0
    %1473 = vmatprep.subr.bf16.mxu0 0
    %1474 = vmatpush1.bf16.msra.mxu0 0
    %1475 = vmatprep.mubr.bf16.mxu0 0
    %1476 = vmatmul.mubr.bf16.gmra.mrb[0].mxu0 %v1394
    %v1477 = vpop.f32.mrb[0].mxu0
    %v1478 = vadd.f32 0.0, %v1477
    %v1479 = vpop.f32.mrb[0].mxu0
    %v1480 = vpop.f32.mrb[0].mxu0
    %v1481 = vpop.f32.mrb[0].mxu0
    %1482 = vdwg.mxu0
    %v1483 = vmul.f32 %v1478, %v1073
    %v1484 = vmul.f32 %v1381, %v1383
    %v1485 = vpack.c.bf16 %v1484, %v1484
    %1486 = vmatprep.subr.bf16.mxu0 0
    %1487 = vmatpush1.bf16.msra.mxu0 %v1427
    %1488 = vmatprep.subr.bf16.mxu0 0
    %1489 = vmatpush1.bf16.msra.mxu0 %v1428
    %1490 = vmatprep.subr.bf16.mxu0 0
    %1491 = vmatpush1.bf16.msra.mxu0 %v1429
    %1492 = vmatprep.subr.bf16.mxu0 0
    %1493 = vmatpush1.bf16.msra.mxu0 %v1430
    %1494 = vmatprep.subr.bf16.mxu0 0
    %1495 = vmatpush1.bf16.msra.mxu0 %v1431
    %1496 = vmatprep.subr.bf16.mxu0 0
    %1497 = vmatpush1.bf16.msra.mxu0 %v1432
    %1498 = vmatprep.subr.bf16.mxu0 0
    %1499 = vmatpush1.bf16.msra.mxu0 %v1433
    %1500 = vmatprep.subr.bf16.mxu0 0
    %1501 = vmatpush1.bf16.msra.mxu0 %v1434
    %1502 = vmatprep.subr.bf16.mxu0 0
    %1503 = vmatpush1.bf16.msra.mxu0 0
    %1504 = vmatprep.subr.bf16.mxu0 0
    %1505 = vmatpush1.bf16.msra.mxu0 0
    %1506 = vmatprep.subr.bf16.mxu0 0
    %1507 = vmatpush1.bf16.msra.mxu0 0
    %1508 = vmatprep.subr.bf16.mxu0 0
    %1509 = vmatpush1.bf16.msra.mxu0 0
    %1510 = vmatprep.subr.bf16.mxu0 0
    %1511 = vmatpush1.bf16.msra.mxu0 0
    %1512 = vmatprep.subr.bf16.mxu0 0
    %1513 = vmatpush1.bf16.msra.mxu0 0
    %1514 = vmatprep.subr.bf16.mxu0 0
    %1515 = vmatpush1.bf16.msra.mxu0 0
    %1516 = vmatprep.subr.bf16.mxu0 0
    %1517 = vmatpush1.bf16.msra.mxu0 0
    %1518 = vmatprep.mubr.bf16.mxu0 0
    %1519 = vmatmul.mubr.bf16.gmra.mrb[0].mxu0 %v1485
    %v1520 = vpop.f32.mrb[0].mxu0
    %v1521 = vadd.f32 0.0, %v1520
    %v1522 = vpop.f32.mrb[0].mxu0
    %v1523 = vpop.f32.mrb[0].mxu0
    %v1524 = vpop.f32.mrb[0].mxu0
    %1525 = vdwg.mxu0
    %v1526 = vmul.f32 %v1521, %v1154
    %v1527 = vadd.f32 %v1483, %v1526
    %v1528 = vmul.f32 %v1387, %v1392
    %v1529 = vpack.c.bf16 %v1528, %v1528
    %1530 = vmatprep.subr.bf16.mxu0 0
    %1531 = vmatpush1.bf16.msra.mxu0 %v1427
    %1532 = vmatprep.subr.bf16.mxu0 0
    %1533 = vmatpush1.bf16.msra.mxu0 %v1428
    %1534 = vmatprep.subr.bf16.mxu0 0
    %1535 = vmatpush1.bf16.msra.mxu0 %v1429
    %1536 = vmatprep.subr.bf16.mxu0 0
    %1537 = vmatpush1.bf16.msra.mxu0 %v1430
    %1538 = vmatprep.subr.bf16.mxu0 0
    %1539 = vmatpush1.bf16.msra.mxu0 %v1431
    %1540 = vmatprep.subr.bf16.mxu0 0
    %1541 = vmatpush1.bf16.msra.mxu0 %v1432
    %1542 = vmatprep.subr.bf16.mxu0 0
    %1543 = vmatpush1.bf16.msra.mxu0 %v1433
    %1544 = vmatprep.subr.bf16.mxu0 0
    %1545 = vmatpush1.bf16.msra.mxu0 %v1434
    %1546 = vmatprep.subr.bf16.mxu0 0
    %1547 = vmatpush1.bf16.msra.mxu0 0
    %1548 = vmatprep.subr.bf16.mxu0 0
    %1549 = vmatpush1.bf16.msra.mxu0 0
    %1550 = vmatprep.subr.bf16.mxu0 0
    %1551 = vmatpush1.bf16.msra.mxu0 0
    %1552 = vmatprep.subr.bf16.mxu0 0
    %1553 = vmatpush1.bf16.msra.mxu0 0
    %1554 = vmatprep.subr.bf16.mxu0 0
    %1555 = vmatpush1.bf16.msra.mxu0 0
    %1556 = vmatprep.subr.bf16.mxu0 0
    %1557 = vmatpush1.bf16.msra.mxu0 0
    %1558 = vmatprep.subr.bf16.mxu0 0
    %1559 = vmatpush1.bf16.msra.mxu0 0
    %1560 = vmatprep.subr.bf16.mxu0 0
    %1561 = vmatpush1.bf16.msra.mxu0 0
    %1562 = vmatprep.mubr.bf16.mxu0 0
    %1563 = vmatmul.mubr.bf16.gmra.mrb[0].mxu0 %v1529
    %v1564 = vpop.f32.mrb[0].mxu0
    %v1565 = vadd.f32 0.0, %v1564
    %v1566 = vpop.f32.mrb[0].mxu0
    %v1567 = vpop.f32.mrb[0].mxu0
    %v1568 = vpop.f32.mrb[0].mxu0
    %1569 = vdwg.mxu0
    %v1570 = vmul.f32 %v1565, %v1073
    %v1571 = vmul.f32 %v1390, %v1392
    %v1572 = vpack.c.bf16 %v1571, %v1571
    %1573 = vmatprep.subr.bf16.mxu0 0
    %1574 = vmatpush1.bf16.msra.mxu0 %v1427
    %1575 = vmatprep.subr.bf16.mxu0 0
    %1576 = vmatpush1.bf16.msra.mxu0 %v1428
    %1577 = vmatprep.subr.bf16.mxu0 0
    %1578 = vmatpush1.bf16.msra.mxu0 %v1429
    %1579 = vmatprep.subr.bf16.mxu0 0
    %1580 = vmatpush1.bf16.msra.mxu0 %v1430
    %1581 = vmatprep.subr.bf16.mxu0 0
    %1582 = vmatpush1.bf16.msra.mxu0 %v1431
    %1583 = vmatprep.subr.bf16.mxu0 0
    %1584 = vmatpush1.bf16.msra.mxu0 %v1432
    %1585 = vmatprep.subr.bf16.mxu0 0
    %1586 = vmatpush1.bf16.msra.mxu0 %v1433
    %1587 = vmatprep.subr.bf16.mxu0 0
    %1588 = vmatpush1.bf16.msra.mxu0 %v1434
    %1589 = vmatprep.subr.bf16.mxu0 0
    %1590 = vmatpush1.bf16.msra.mxu0 0
    %1591 = vmatprep.subr.bf16.mxu0 0
    %1592 = vmatpush1.bf16.msra.mxu0 0
    %1593 = vmatprep.subr.bf16.mxu0 0
    %1594 = vmatpush1.bf16.msra.mxu0 0
    %1595 = vmatprep.subr.bf16.mxu0 0
    %1596 = vmatpush1.bf16.msra.mxu0 0
    %1597 = vmatprep.subr.bf16.mxu0 0
    %1598 = vmatpush1.bf16.msra.mxu0 0
    %1599 = vmatprep.subr.bf16.mxu0 0
    %1600 = vmatpush1.bf16.msra.mxu0 0
    %1601 = vmatprep.subr.bf16.mxu0 0
    %1602 = vmatpush1.bf16.msra.mxu0 0
    %1603 = vmatprep.subr.bf16.mxu0 0
    %1604 = vmatpush1.bf16.msra.mxu0 0
    %1605 = vmatprep.mubr.bf16.mxu0 0
    %1606 = vmatmul.mubr.bf16.gmra.mrb[0].mxu0 %v1572
    %v1607 = vpop.f32.mrb[0].mxu0
    %v1608 = vadd.f32 0.0, %v1607
    %v1609 = vpop.f32.mrb[0].mxu0
    %v1610 = vpop.f32.mrb[0].mxu0
    %v1611 = vpop.f32.mrb[0].mxu0
    %1612 = vdwg.mxu0
    %v1613 = vmul.f32 %v1608, %v1154
    %v1614 = vadd.f32 %v1570, %v1613
    %v1615 = vpack.c.bf16 %v1527, %v1527
    %v1616 = vpack.c.bf16 %v1614, %v1614
    %v1617 = vld [vmem:[#allocation10] sm:$0xf]
    %v1618 = vld [vmem:[#allocation10 + $0x4] sm:$0xf]
    %v1619 = vld [vmem:[#allocation10 + $0x8] sm:$0xf]
    %v1620 = vld [vmem:[#allocation10 + $0xc] sm:$0xf]
    %v1621 = vld [vmem:[#allocation10 + $0x10] sm:$0xf]
    %v1622 = vld [vmem:[#allocation10 + $0x14] sm:$0xf]
    %v1623 = vld [vmem:[#allocation10 + $0x18] sm:$0xf]
    %v1624 = vld [vmem:[#allocation10 + $0x1c] sm:$0xf]
    %v1625 = vld [vmem:[#allocation10 + $0x20] sm:$0xf]
    %v1626 = vld [vmem:[#allocation10 + $0x24] sm:$0xf]
    %v1627 = vld [vmem:[#allocation10 + $0x28] sm:$0xf]
    %v1628 = vld [vmem:[#allocation10 + $0x2c] sm:$0xf]
    %v1629 = vld [vmem:[#allocation10 + $0x30] sm:$0xf]
    %v1630 = vld [vmem:[#allocation10 + $0x34] sm:$0xf]
    %v1631 = vld [vmem:[#allocation10 + $0x38] sm:$0xf]
    %v1632 = vld [vmem:[#allocation10 + $0x3c] sm:$0xf]
    %v1633 = vld [vmem:[#allocation10 + $0x40] sm:$0xf]
    %v1634 = vld [vmem:[#allocation10 + $0x44] sm:$0xf]
    %v1635 = vld [vmem:[#allocation10 + $0x48] sm:$0xf]
    %v1636 = vld [vmem:[#allocation10 + $0x4c] sm:$0xf]
    %v1637 = vld [vmem:[#allocation10 + $0x50] sm:$0xf]
    %v1638 = vld [vmem:[#allocation10 + $0x54] sm:$0xf]
    %v1639 = vld [vmem:[#allocation10 + $0x58] sm:$0xf]
    %v1640 = vld [vmem:[#allocation10 + $0x5c] sm:$0xf]
    %v1641 = vld [vmem:[#allocation10 + $0x60] sm:$0xf]
    %v1642 = vld [vmem:[#allocation10 + $0x64] sm:$0xf]
    %v1643 = vld [vmem:[#allocation10 + $0x68] sm:$0xf]
    %v1644 = vld [vmem:[#allocation10 + $0x6c] sm:$0xf]
    %v1645 = vld [vmem:[#allocation10 + $0x70] sm:$0xf]
    %v1646 = vld [vmem:[#allocation10 + $0x74] sm:$0xf]
    %v1647 = vld [vmem:[#allocation10 + $0x78] sm:$0xf]
    %v1648 = vld [vmem:[#allocation10 + $0x7c] sm:$0xf]
    %v1650 = vlaneseq
    %v1651 = vshrl.u32 %v1650, 7
    %v1652 = vsub.s32 0, %v1651
    %v1653 = vrot.slane %v91, %v1652
    %v1687 = vunpack.c.l.b16 %v1617
    %v1688 = vunpack.c.l.b16 %v1618
    %v1689 = vunpack.c.l.b16 %v1619
    %v1690 = vunpack.c.l.b16 %v1620
    %v1691 = vunpack.c.l.b16 %v1621
    %v1692 = vunpack.c.l.b16 %v1622
    %v1693 = vunpack.c.l.b16 %v1623
    %v1694 = vunpack.c.l.b16 %v1624
    %v1695 = vunpack.c.l.b16 %v1625
    %v1696 = vunpack.c.l.b16 %v1626
    %v1697 = vunpack.c.l.b16 %v1627
    %v1698 = vunpack.c.l.b16 %v1628
    %v1699 = vunpack.c.l.b16 %v1629
    %v1700 = vunpack.c.l.b16 %v1630
    %v1701 = vunpack.c.l.b16 %v1631
    %v1702 = vunpack.c.l.b16 %v1632
    %v1703 = vunpack.c.l.b16 %v1633
    %v1704 = vunpack.c.l.b16 %v1634
    %v1705 = vunpack.c.l.b16 %v1635
    %v1706 = vunpack.c.l.b16 %v1636
    %v1707 = vunpack.c.l.b16 %v1637
    %v1708 = vunpack.c.l.b16 %v1638
    %v1709 = vunpack.c.l.b16 %v1639
    %v1710 = vunpack.c.l.b16 %v1640
    %v1711 = vunpack.c.l.b16 %v1641
    %v1712 = vunpack.c.l.b16 %v1642
    %v1713 = vunpack.c.l.b16 %v1643
    %v1714 = vunpack.c.l.b16 %v1644
    %v1715 = vunpack.c.l.b16 %v1645
    %v1716 = vunpack.c.l.b16 %v1646
    %v1717 = vunpack.c.l.b16 %v1647
    %v1718 = vunpack.c.l.b16 %v1648
    %v1719 = vpack.c.b16 %v1688, %v1687
    %v1720 = vpack.c.b16 %v1690, %v1689
    %v1721 = vpack.c.b16 %v1692, %v1691
    %v1722 = vpack.c.b16 %v1694, %v1693
    %v1723 = vpack.c.b16 %v1696, %v1695
    %v1724 = vpack.c.b16 %v1698, %v1697
    %v1725 = vpack.c.b16 %v1700, %v1699
    %v1726 = vpack.c.b16 %v1702, %v1701
    %v1727 = vpack.c.b16 %v1704, %v1703
    %v1728 = vpack.c.b16 %v1706, %v1705
    %v1729 = vpack.c.b16 %v1708, %v1707
    %v1730 = vpack.c.b16 %v1710, %v1709
    %v1731 = vpack.c.b16 %v1712, %v1711
    %v1732 = vpack.c.b16 %v1714, %v1713
    %v1733 = vpack.c.b16 %v1716, %v1715
    %v1734 = vpack.c.b16 %v1718, %v1717
    %1751 = vmatprep.subr.bf16.mxu0 0
    %1752 = vmatpush1.bf16.msra.mxu0 %v1719
    %1753 = vmatprep.subr.bf16.mxu0 0
    %1754 = vmatpush1.bf16.msra.mxu0 %v1720
    %1755 = vmatprep.subr.bf16.mxu0 0
    %1756 = vmatpush1.bf16.msra.mxu0 %v1721
    %1757 = vmatprep.subr.bf16.mxu0 0
    %1758 = vmatpush1.bf16.msra.mxu0 %v1722
    %1759 = vmatprep.subr.bf16.mxu0 0
    %1760 = vmatpush1.bf16.msra.mxu0 %v1723
    %1761 = vmatprep.subr.bf16.mxu0 0
    %1762 = vmatpush1.bf16.msra.mxu0 %v1724
    %1763 = vmatprep.subr.bf16.mxu0 0
    %1764 = vmatpush1.bf16.msra.mxu0 %v1725
    %1765 = vmatprep.subr.bf16.mxu0 0
    %1766 = vmatpush1.bf16.msra.mxu0 %v1726
    %1767 = vmatprep.subr.bf16.mxu0 0
    %1768 = vmatpush1.bf16.msra.mxu0 %v1727
    %1769 = vmatprep.subr.bf16.mxu0 0
    %1770 = vmatpush1.bf16.msra.mxu0 %v1728
    %1771 = vmatprep.subr.bf16.mxu0 0
    %1772 = vmatpush1.bf16.msra.mxu0 %v1729
    %1773 = vmatprep.subr.bf16.mxu0 0
    %1774 = vmatpush1.bf16.msra.mxu0 %v1730
    %1775 = vmatprep.subr.bf16.mxu0 0
    %1776 = vmatpush1.bf16.msra.mxu0 %v1731
    %1777 = vmatprep.subr.bf16.mxu0 0
    %1778 = vmatpush1.bf16.msra.mxu0 %v1732
    %1779 = vmatprep.subr.bf16.mxu0 0
    %1780 = vmatpush1.bf16.msra.mxu0 %v1733
    %1781 = vmatprep.subr.bf16.mxu0 0
    %1782 = vmatpush1.bf16.msra.mxu0 %v1734
    %1783 = vmatprep.mubr.bf16.mxu0 %v1616
    %1784 = vmatmul.mubr.bf16.gmra.mrb[0].mxu0 %v1615
    %v1785 = vpop.f32.mrb[0].mxu0
    %v1786 = vadd.f32 %v1653, %v1785
    %v1787 = vpop.f32.mrb[0].mxu0
    %v1788 = vpop.f32.mrb[0].mxu0
    %v1789 = vpop.f32.mrb[0].mxu0
    %1790 = vdwg.mxu0
    %v1791 = vpack.c.bf16 %v1786, %v1786
    %v1793 = vlaneseq
    %v1794 = vshrl.u32 %v1793, 7
    %v1795 = vsub.s32 0, %v1794
    %v1796 = vrot.slane %v92, %v1795
    %v1814 = vunpack.c.l.b16 %v253
    %v1815 = vunpack.c.l.b16 %v254
    %v1816 = vunpack.c.l.b16 %v255
    %v1817 = vunpack.c.l.b16 %v256
    %v1818 = vunpack.c.l.b16 %v257
    %v1819 = vunpack.c.l.b16 %v258
    %v1820 = vunpack.c.l.b16 %v259
    %v1821 = vunpack.c.l.b16 %v260
    %v1822 = vunpack.c.l.b16 %v261
    %v1823 = vunpack.c.l.b16 %v262
    %v1824 = vunpack.c.l.b16 %v263
    %v1825 = vunpack.c.l.b16 %v264
    %v1826 = vunpack.c.l.b16 %v265
    %v1827 = vunpack.c.l.b16 %v266
    %v1828 = vunpack.c.l.b16 %v267
    %v1829 = vunpack.c.l.b16 %v268
    %v1830 = vpack.c.b16 %v1815, %v1814
    %v1831 = vpack.c.b16 %v1817, %v1816
    %v1832 = vpack.c.b16 %v1819, %v1818
    %v1833 = vpack.c.b16 %v1821, %v1820
    %v1834 = vpack.c.b16 %v1823, %v1822
    %v1835 = vpack.c.b16 %v1825, %v1824
    %v1836 = vpack.c.b16 %v1827, %v1826
    %v1837 = vpack.c.b16 %v1829, %v1828
    %1846 = vmatprep.subr.bf16.mxu0 0
    %1847 = vmatpush1.bf16.msra.mxu0 %v1830
    %1848 = vmatprep.subr.bf16.mxu0 0
    %1849 = vmatpush1.bf16.msra.mxu0 %v1831
    %1850 = vmatprep.subr.bf16.mxu0 0
    %1851 = vmatpush1.bf16.msra.mxu0 %v1832
    %1852 = vmatprep.subr.bf16.mxu0 0
    %1853 = vmatpush1.bf16.msra.mxu0 %v1833
    %1854 = vmatprep.subr.bf16.mxu0 0
    %1855 = vmatpush1.bf16.msra.mxu0 %v1834
    %1856 = vmatprep.subr.bf16.mxu0 0
    %1857 = vmatpush1.bf16.msra.mxu0 %v1835
    %1858 = vmatprep.subr.bf16.mxu0 0
    %1859 = vmatpush1.bf16.msra.mxu0 %v1836
    %1860 = vmatprep.subr.bf16.mxu0 0
    %1861 = vmatpush1.bf16.msra.mxu0 %v1837
    %1862 = vmatprep.subr.bf16.mxu0 0
    %1863 = vmatpush1.bf16.msra.mxu0 0
    %1864 = vmatprep.subr.bf16.mxu0 0
    %1865 = vmatpush1.bf16.msra.mxu0 0
    %1866 = vmatprep.subr.bf16.mxu0 0
    %1867 = vmatpush1.bf16.msra.mxu0 0
    %1868 = vmatprep.subr.bf16.mxu0 0
    %1869 = vmatpush1.bf16.msra.mxu0 0
    %1870 = vmatprep.subr.bf16.mxu0 0
    %1871 = vmatpush1.bf16.msra.mxu0 0
    %1872 = vmatprep.subr.bf16.mxu0 0
    %1873 = vmatpush1.bf16.msra.mxu0 0
    %1874 = vmatprep.subr.bf16.mxu0 0
    %1875 = vmatpush1.bf16.msra.mxu0 0
    %1876 = vmatprep.subr.bf16.mxu0 0
    %1877 = vmatpush1.bf16.msra.mxu0 0
    %1878 = vmatprep.mubr.bf16.mxu0 0
    %1879 = vmatmul.mubr.bf16.gmra.mrb[0].mxu0 %v1791
    %v1880 = vpop.f32.mrb[0].mxu0
    %v1881 = vadd.f32 %v1796, %v1880
    %v1882 = vpop.f32.mrb[0].mxu0
    %v1883 = vpop.f32.mrb[0].mxu0
    %v1884 = vpop.f32.mrb[0].mxu0
    %1885 = vdwg.mxu0
    %v1886 = vpack.c.bf16 %v1881, %v1881
    %1887 = vst [vmem:[#allocation11] sm:$0xf] %v1886
    // Predicated region
    $region46: #{tpu_custom_call.1} parent=1 // pred_check
      _
    $region47: #{tpu_custom_call.1} parent=1 // pred_check_branch
      %1889 = sbr.rel (0) target = $region49
    $region48: #{tpu_custom_call.1} parent=1 // pred_region
      %s1891 = ssub.s32 64, 64
      %1892 = vsyncadd [#allocation4], %s1891
      %s1894 = sshll.u32 [#allocation11], 4
      %s1895 = int_to_ptr.vmem [resolvable:$true] %s1894
      %1897 = dma.vmem_to_hbm [thread:$0]  %s1895, 64, %s6, [#allocation4]
    $region49: #{tpu_custom_call.1} parent=1 // pred_fallthru
      _
    // Predicated region
    $region50: #{tpu_custom_call.1} parent=1 // pred_check
      _
    $region51: #{tpu_custom_call.1} parent=1 // pred_check_branch
      %1899 = sbr.rel (0) target = $region53
    $region52: #{tpu_custom_call.1} parent=1 // pred_region
      %1900 = dma.done [#allocation4], 64
    $region53: #{tpu_custom_call.1} parent=1 // pred_fallthru
      _
    %1901 = vsyncpa [#allocation3], 1
    %1902 = vsyncpa [#allocation6], 1
    %1903 = vsyncpa [#allocation9], 1
    %1904 = vsyncpa [#allocation4], 1

</llo_original>
